<compile_context>
chip_gen: v6e
topology: v6e:2x2x1
jax: 0.10.0
libtpu: 0.0.40
codegen_flags: <defaults>
</compile_context>

<pallas_src>
import math

import jax
import jax.numpy as jnp
from jax import lax
from jax.experimental import pallas as pl
from jax.experimental.pallas import tpu as pltpu

D_MODEL = 32
NUM_HEADS = 2
D_K = D_MODEL // NUM_HEADS
D_FF = 64
BATCH = 2
SEQ = 8
LN_EPS = 1e-5  # PyTorch nn.LayerNorm default


def _layernorm(x, gamma, beta):
    mu = jnp.mean(x, axis=-1, keepdims=True)
    xc = x - mu
    var = jnp.mean(xc * xc, axis=-1, keepdims=True)
    inv = jax.lax.rsqrt(var + LN_EPS)
    return xc * inv * gamma + beta


def encoder_layer_kernel(x_ref, wpack_ref, w1_ref, vecs_ref, o_ref):
    f32 = jnp.float32
    x = x_ref[...].astype(f32)                          # (B*S, D)

    wp = wpack_ref[...]                                 # (2*D + D_FF, D)
    wq = wp[0:D_MODEL]                                  # (D, D)
    wo = wp[D_MODEL:2 * D_MODEL]                        # (D, D)
    w2 = wp[2 * D_MODEL:2 * D_MODEL + D_FF]             # (D_FF, D)
    w1 = w1_ref[...]                                    # (D, D_FF)

    v = vecs_ref[...]                                   # (8, D_FF) packed small vectors
    bq  = v[0:1, :D_MODEL]
    bo  = v[1:2, :D_MODEL]
    g1  = v[2:3, :D_MODEL]
    be1 = v[3:4, :D_MODEL]
    bf1 = v[4:5, :]
    bf2 = v[5:6, :D_MODEL]
    g2  = v[6:7, :D_MODEL]
    be2 = v[7:8, :D_MODEL]

    # --- self attention: q_linear used for q, k and v (faithful to reference) ---
    q = jnp.dot(x, wq, preferred_element_type=f32) + bq  # (B*S, D)

    scale = 1.0 / math.sqrt(D_K)
    dn = (((1,), (1,)), ((), ()))      # contract dim 1 of both operands: q @ k^T, no transpose

    z_rows = []
    for b in range(BATCH):                               # static unroll over batch
        qb = q[b * SEQ:(b + 1) * SEQ]                    # (S, D) sublane slice
        zb = None
        for h in range(NUM_HEADS):                       # static unroll over heads
            c0 = h * D_K
            qh = qb[:, c0:c0 + D_K]                      # (S, d_k); k = v = q
            scores = lax.dot_general(qh, qh, dn, preferred_element_type=f32) * scale
            scores = scores - jnp.max(scores, axis=-1, keepdims=True)
            e = jnp.exp(scores)
            attn = e * pl.reciprocal(jnp.sum(e, axis=-1, keepdims=True), approx=True)
            head_out = jnp.dot(attn, qh, preferred_element_type=f32)          # (S, d_k)
            # project through the matching sublane rows of Wo and accumulate
            contrib = jnp.dot(head_out, wo[c0:c0 + D_K], preferred_element_type=f32)
            zb = contrib if zb is None else zb + contrib
        z_rows.append(zb + bo)
    z = jnp.concatenate(z_rows, axis=0)                  # (B*S, D) sublane concat

    # TODO(synk): dropout (p=0.1) treated as identity (inference mode).
    x = x + z
    x = _layernorm(x, g1, be1)

    # --- position-wise feed-forward ---
    h1 = jnp.dot(x, w1, preferred_element_type=f32) + bf1
    h1 = jnp.maximum(h1, 0.0)
    z = jnp.dot(h1, w2, preferred_element_type=f32) + bf2

    x = x + z
    x = _layernorm(x, g2, be2)
    o_ref[...] = x.astype(o_ref.dtype)                   # single (B*S, D) store


def encoder_layer(x, params):
    (wq, bq, wo, bo, g1, be1, w1, bf1, w2, bf2, g2, be2) = params
    B, S, D = x.shape

    x2 = x.reshape(B * S, D)                             # contiguous reshape, free in XLA
    wpack = jnp.concatenate([wq, wo, w2], axis=0)        # (2*D + D_FF, D)

    def _row(vec):                                       # pad (1, n) -> (1, D_FF)
        return jnp.pad(vec, ((0, 0), (0, D_FF - vec.shape[-1])))

    vecs = jnp.concatenate(
        [_row(bq), _row(bo), _row(g1), _row(be1),
         _row(bf1), _row(bf2), _row(g2), _row(be2)], axis=0)   # (8, D_FF)

    vmem = pl.BlockSpec(memory_space=pltpu.MemorySpace.VMEM)
    out2 = pl.pallas_call(
        encoder_layer_kernel,
        out_shape=jax.ShapeDtypeStruct((B * S, D), x.dtype),
        in_specs=[vmem, vmem, vmem, vmem],
        out_specs=vmem,
    )(x2, wpack, w1, vecs)
    return out2.reshape(B, S, D)


def make_params(key):
    ks = jax.random.split(key, 8)
    scale = 0.1
    wq = scale * jax.random.normal(ks[0], (D_MODEL, D_MODEL), jnp.float32)
    bq = scale * jax.random.normal(ks[1], (1, D_MODEL), jnp.float32)
    wo = scale * jax.random.normal(ks[2], (D_MODEL, D_MODEL), jnp.float32)
    bo = scale * jax.random.normal(ks[3], (1, D_MODEL), jnp.float32)
    g1 = jnp.ones((1, D_MODEL), jnp.float32)
    be1 = jnp.zeros((1, D_MODEL), jnp.float32)
    w1 = scale * jax.random.normal(ks[4], (D_MODEL, D_FF), jnp.float32)
    bf1 = scale * jax.random.normal(ks[5], (1, D_FF), jnp.float32)
    w2 = scale * jax.random.normal(ks[6], (D_FF, D_MODEL), jnp.float32)
    bf2 = scale * jax.random.normal(ks[7], (1, D_MODEL), jnp.float32)
    g2 = jnp.ones((1, D_MODEL), jnp.float32)
    be2 = jnp.zeros((1, D_MODEL), jnp.float32)
    return (wq, bq, wo, bo, g1, be1, w1, bf1, w2, bf2, g2, be2)


def reference_encoder_layer(x, params):
    """Pure-JAX reference mirroring the kernel math (exact division in softmax)."""
    (wq, bq, wo, bo, g1, be1, w1, bf1, w2, bf2, g2, be2) = params
    q = x @ wq + bq
    k = q
    v = q
    outs = []
    for h in range(NUM_HEADS):
        sl = slice(h * D_K, (h + 1) * D_K)
        qh, kh, vh = q[..., sl], k[..., sl], v[..., sl]
        s = jnp.einsum("bqd,bkd->bqk", qh, kh) / math.sqrt(D_K)
        a = jax.nn.softmax(s, axis=-1)
        outs.append(jnp.einsum("bqk,bkd->bqd", a, vh))
    z = jnp.concatenate(outs, axis=-1) @ wo + bo
    x = x + z
    x = _layernorm(x, g1, be1)
    h1 = jax.nn.relu(x @ w1 + bf1)
    z = h1 @ w2 + bf2
    x = x + z
    x = _layernorm(x, g2, be2)
    return x


if __name__ == "__main__":
    key = jax.random.PRNGKey(0)
    kx, kp = jax.random.split(key)
    x = jax.random.normal(kx, (BATCH, SEQ, D_MODEL), jnp.float32)
    params = make_params(kp)

    out = jax.block_until_ready(encoder_layer(x, params))
    ref = reference_encoder_layer(x, params)

    assert out.shape == (BATCH, SEQ, D_MODEL)
    # Tolerance accommodates the EUP approximate reciprocal in the softmax (the
    # only intentional deviation from exact f32 math); observed error << 1e-3.
    assert jnp.allclose(out, ref, atol=1e-3, rtol=1e-3), "mismatch vs JAX reference"
    print("KERNEL_OK")
</pallas_src>

<mosaic_0001>
module attributes {stable_mosaic.version = 11 : i64} {
  func.func @encoder_layer_kernel(%arg0: memref<16x32xf32, #tpu.memory_space<vmem>>, %arg1: memref<128x32xf32, #tpu.memory_space<vmem>>, %arg2: memref<32x64xf32, #tpu.memory_space<vmem>>, %arg3: memref<8x64xf32, #tpu.memory_space<vmem>>, %arg4: memref<16x32xf32, #tpu.memory_space<vmem>>) attributes {dimension_semantics = [], scalar_prefetch = 0 : i64, scratch_operands = 0 : i64, tpu.core_type = #tpu.core_type<tc>} {
    %c0 = arith.constant 0 : index
    %c0_0 = arith.constant 0 : index
    %0 = vector.load %arg0[%c0, %c0_0] : memref<16x32xf32, #tpu.memory_space<vmem>>, vector<16x32xf32>
    %c0_1 = arith.constant 0 : index
    %c0_2 = arith.constant 0 : index
    %1 = vector.load %arg1[%c0_1, %c0_2] : memref<128x32xf32, #tpu.memory_space<vmem>>, vector<128x32xf32>
    %2 = vector.extract_strided_slice %1 {offsets = [0, 0], sizes = [32, 32], strides = [1, 1]} : vector<128x32xf32> to vector<32x32xf32>
    %3 = vector.extract_strided_slice %1 {offsets = [32, 0], sizes = [32, 32], strides = [1, 1]} : vector<128x32xf32> to vector<32x32xf32>
    %4 = vector.extract_strided_slice %1 {offsets = [64, 0], sizes = [64, 32], strides = [1, 1]} : vector<128x32xf32> to vector<64x32xf32>
    %c0_3 = arith.constant 0 : index
    %c0_4 = arith.constant 0 : index
    %5 = vector.load %arg2[%c0_3, %c0_4] : memref<32x64xf32, #tpu.memory_space<vmem>>, vector<32x64xf32>
    %c0_5 = arith.constant 0 : index
    %c0_6 = arith.constant 0 : index
    %6 = vector.load %arg3[%c0_5, %c0_6] : memref<8x64xf32, #tpu.memory_space<vmem>>, vector<8x64xf32>
    %7 = vector.extract_strided_slice %6 {offsets = [0, 0], sizes = [1, 32], strides = [1, 1]} : vector<8x64xf32> to vector<1x32xf32>
    %8 = vector.extract_strided_slice %6 {offsets = [1, 0], sizes = [1, 32], strides = [1, 1]} : vector<8x64xf32> to vector<1x32xf32>
    %9 = vector.extract_strided_slice %6 {offsets = [2, 0], sizes = [1, 32], strides = [1, 1]} : vector<8x64xf32> to vector<1x32xf32>
    %10 = vector.extract_strided_slice %6 {offsets = [3, 0], sizes = [1, 32], strides = [1, 1]} : vector<8x64xf32> to vector<1x32xf32>
    %11 = vector.extract_strided_slice %6 {offsets = [4, 0], sizes = [1, 64], strides = [1, 1]} : vector<8x64xf32> to vector<1x64xf32>
    %12 = vector.extract_strided_slice %6 {offsets = [5, 0], sizes = [1, 32], strides = [1, 1]} : vector<8x64xf32> to vector<1x32xf32>
    %13 = vector.extract_strided_slice %6 {offsets = [6, 0], sizes = [1, 32], strides = [1, 1]} : vector<8x64xf32> to vector<1x32xf32>
    %14 = vector.extract_strided_slice %6 {offsets = [7, 0], sizes = [1, 32], strides = [1, 1]} : vector<8x64xf32> to vector<1x32xf32>
    %cst = arith.constant dense<0.000000e+00> : vector<16x32xf32>
    %15 = tpu.matmul %0, %2, %cst {dimension_numbers = #tpu.dot_dimension_numbers<[1], [0], [0], [1], [0, 0, 1, 1], [], []>} : vector<16x32xf32>, vector<32x32xf32>, vector<16x32xf32> -> vector<16x32xf32>
    %16 = vector.broadcast %7 : vector<1x32xf32> to vector<16x32xf32>
    %17 = arith.addf %15, %16 : vector<16x32xf32>
    %18 = vector.extract_strided_slice %17 {offsets = [0, 0], sizes = [8, 32], strides = [1, 1]} : vector<16x32xf32> to vector<8x32xf32>
    %19 = vector.extract_strided_slice %18 {offsets = [0, 0], sizes = [8, 16], strides = [1, 1]} : vector<8x32xf32> to vector<8x16xf32>
    %cst_7 = arith.constant dense<0.000000e+00> : vector<8x8xf32>
    %20 = tpu.matmul %19, %19, %cst_7 {dimension_numbers = #tpu.dot_dimension_numbers<[1], [1], [0], [0], [0, 0, 1, 0], [], []>} : vector<8x16xf32>, vector<8x16xf32>, vector<8x8xf32> -> vector<8x8xf32>
    %cst_8 = arith.constant 2.500000e-01 : f32
    %21 = vector.broadcast %cst_8 : f32 to vector<8x8xf32>
    %22 = arith.mulf %20, %21 : vector<8x8xf32>
    %cst_9 = arith.constant dense<0xFF800000> : vector<8xf32>
    %23 = vector.multi_reduction <maximumf>, %22, %cst_9 [1] : vector<8x8xf32> to vector<8xf32>
    %24 = vector.shape_cast %23 : vector<8xf32> to vector<8x1xf32>
    %25 = vector.broadcast %24 : vector<8x1xf32> to vector<8x8xf32>
    %26 = arith.subf %22, %25 : vector<8x8xf32>
    %27 = math.exp %26 : vector<8x8xf32>
    %cst_10 = arith.constant dense<0.000000e+00> : vector<8xf32>
    %28 = vector.multi_reduction <add>, %27, %cst_10 [1] : vector<8x8xf32> to vector<8xf32>
    %29 = vector.shape_cast %28 : vector<8xf32> to vector<8x1xf32>
    %30 = tpu.reciprocal %29 {approx = true} : vector<8x1xf32> -> vector<8x1xf32>
    %31 = vector.broadcast %30 : vector<8x1xf32> to vector<8x8xf32>
    %32 = arith.mulf %27, %31 : vector<8x8xf32>
    %cst_11 = arith.constant dense<0.000000e+00> : vector<8x16xf32>
    %33 = tpu.matmul %32, %19, %cst_11 {dimension_numbers = #tpu.dot_dimension_numbers<[1], [0], [0], [1], [0, 0, 1, 1], [], []>} : vector<8x8xf32>, vector<8x16xf32>, vector<8x16xf32> -> vector<8x16xf32>
    %34 = vector.extract_strided_slice %3 {offsets = [0, 0], sizes = [16, 32], strides = [1, 1]} : vector<32x32xf32> to vector<16x32xf32>
    %cst_12 = arith.constant dense<0.000000e+00> : vector<8x32xf32>
    %35 = tpu.matmul %33, %34, %cst_12 {dimension_numbers = #tpu.dot_dimension_numbers<[1], [0], [0], [1], [0, 0, 1, 1], [], []>} : vector<8x16xf32>, vector<16x32xf32>, vector<8x32xf32> -> vector<8x32xf32>
    %36 = vector.extract_strided_slice %18 {offsets = [0, 16], sizes = [8, 16], strides = [1, 1]} : vector<8x32xf32> to vector<8x16xf32>
    %cst_13 = arith.constant dense<0.000000e+00> : vector<8x8xf32>
    %37 = tpu.matmul %36, %36, %cst_13 {dimension_numbers = #tpu.dot_dimension_numbers<[1], [1], [0], [0], [0, 0, 1, 0], [], []>} : vector<8x16xf32>, vector<8x16xf32>, vector<8x8xf32> -> vector<8x8xf32>
    %cst_14 = arith.constant 2.500000e-01 : f32
    %38 = vector.broadcast %cst_14 : f32 to vector<8x8xf32>
    %39 = arith.mulf %37, %38 : vector<8x8xf32>
    %cst_15 = arith.constant dense<0xFF800000> : vector<8xf32>
    %40 = vector.multi_reduction <maximumf>, %39, %cst_15 [1] : vector<8x8xf32> to vector<8xf32>
    %41 = vector.shape_cast %40 : vector<8xf32> to vector<8x1xf32>
    %42 = vector.broadcast %41 : vector<8x1xf32> to vector<8x8xf32>
    %43 = arith.subf %39, %42 : vector<8x8xf32>
    %44 = math.exp %43 : vector<8x8xf32>
    %cst_16 = arith.constant dense<0.000000e+00> : vector<8xf32>
    %45 = vector.multi_reduction <add>, %44, %cst_16 [1] : vector<8x8xf32> to vector<8xf32>
    %46 = vector.shape_cast %45 : vector<8xf32> to vector<8x1xf32>
    %47 = tpu.reciprocal %46 {approx = true} : vector<8x1xf32> -> vector<8x1xf32>
    %48 = vector.broadcast %47 : vector<8x1xf32> to vector<8x8xf32>
    %49 = arith.mulf %44, %48 : vector<8x8xf32>
    %cst_17 = arith.constant dense<0.000000e+00> : vector<8x16xf32>
    %50 = tpu.matmul %49, %36, %cst_17 {dimension_numbers = #tpu.dot_dimension_numbers<[1], [0], [0], [1], [0, 0, 1, 1], [], []>} : vector<8x8xf32>, vector<8x16xf32>, vector<8x16xf32> -> vector<8x16xf32>
    %51 = vector.extract_strided_slice %3 {offsets = [16, 0], sizes = [16, 32], strides = [1, 1]} : vector<32x32xf32> to vector<16x32xf32>
    %cst_18 = arith.constant dense<0.000000e+00> : vector<8x32xf32>
    %52 = tpu.matmul %50, %51, %cst_18 {dimension_numbers = #tpu.dot_dimension_numbers<[1], [0], [0], [1], [0, 0, 1, 1], [], []>} : vector<8x16xf32>, vector<16x32xf32>, vector<8x32xf32> -> vector<8x32xf32>
    %53 = arith.addf %35, %52 : vector<8x32xf32>
    %54 = vector.broadcast %8 : vector<1x32xf32> to vector<8x32xf32>
    %55 = arith.addf %53, %54 : vector<8x32xf32>
    %56 = vector.extract_strided_slice %17 {offsets = [8, 0], sizes = [8, 32], strides = [1, 1]} : vector<16x32xf32> to vector<8x32xf32>
    %57 = vector.extract_strided_slice %56 {offsets = [0, 0], sizes = [8, 16], strides = [1, 1]} : vector<8x32xf32> to vector<8x16xf32>
    %cst_19 = arith.constant dense<0.000000e+00> : vector<8x8xf32>
    %58 = tpu.matmul %57, %57, %cst_19 {dimension_numbers = #tpu.dot_dimension_numbers<[1], [1], [0], [0], [0, 0, 1, 0], [], []>} : vector<8x16xf32>, vector<8x16xf32>, vector<8x8xf32> -> vector<8x8xf32>
    %cst_20 = arith.constant 2.500000e-01 : f32
    %59 = vector.broadcast %cst_20 : f32 to vector<8x8xf32>
    %60 = arith.mulf %58, %59 : vector<8x8xf32>
    %cst_21 = arith.constant dense<0xFF800000> : vector<8xf32>
    %61 = vector.multi_reduction <maximumf>, %60, %cst_21 [1] : vector<8x8xf32> to vector<8xf32>
    %62 = vector.shape_cast %61 : vector<8xf32> to vector<8x1xf32>
    %63 = vector.broadcast %62 : vector<8x1xf32> to vector<8x8xf32>
    %64 = arith.subf %60, %63 : vector<8x8xf32>
    %65 = math.exp %64 : vector<8x8xf32>
    %cst_22 = arith.constant dense<0.000000e+00> : vector<8xf32>
    %66 = vector.multi_reduction <add>, %65, %cst_22 [1] : vector<8x8xf32> to vector<8xf32>
    %67 = vector.shape_cast %66 : vector<8xf32> to vector<8x1xf32>
    %68 = tpu.reciprocal %67 {approx = true} : vector<8x1xf32> -> vector<8x1xf32>
    %69 = vector.broadcast %68 : vector<8x1xf32> to vector<8x8xf32>
    %70 = arith.mulf %65, %69 : vector<8x8xf32>
    %cst_23 = arith.constant dense<0.000000e+00> : vector<8x16xf32>
    %71 = tpu.matmul %70, %57, %cst_23 {dimension_numbers = #tpu.dot_dimension_numbers<[1], [0], [0], [1], [0, 0, 1, 1], [], []>} : vector<8x8xf32>, vector<8x16xf32>, vector<8x16xf32> -> vector<8x16xf32>
    %72 = vector.extract_strided_slice %3 {offsets = [0, 0], sizes = [16, 32], strides = [1, 1]} : vector<32x32xf32> to vector<16x32xf32>
    %cst_24 = arith.constant dense<0.000000e+00> : vector<8x32xf32>
    %73 = tpu.matmul %71, %72, %cst_24 {dimension_numbers = #tpu.dot_dimension_numbers<[1], [0], [0], [1], [0, 0, 1, 1], [], []>} : vector<8x16xf32>, vector<16x32xf32>, vector<8x32xf32> -> vector<8x32xf32>
    %74 = vector.extract_strided_slice %56 {offsets = [0, 16], sizes = [8, 16], strides = [1, 1]} : vector<8x32xf32> to vector<8x16xf32>
    %cst_25 = arith.constant dense<0.000000e+00> : vector<8x8xf32>
    %75 = tpu.matmul %74, %74, %cst_25 {dimension_numbers = #tpu.dot_dimension_numbers<[1], [1], [0], [0], [0, 0, 1, 0], [], []>} : vector<8x16xf32>, vector<8x16xf32>, vector<8x8xf32> -> vector<8x8xf32>
    %cst_26 = arith.constant 2.500000e-01 : f32
    %76 = vector.broadcast %cst_26 : f32 to vector<8x8xf32>
    %77 = arith.mulf %75, %76 : vector<8x8xf32>
    %cst_27 = arith.constant dense<0xFF800000> : vector<8xf32>
    %78 = vector.multi_reduction <maximumf>, %77, %cst_27 [1] : vector<8x8xf32> to vector<8xf32>
    %79 = vector.shape_cast %78 : vector<8xf32> to vector<8x1xf32>
    %80 = vector.broadcast %79 : vector<8x1xf32> to vector<8x8xf32>
    %81 = arith.subf %77, %80 : vector<8x8xf32>
    %82 = math.exp %81 : vector<8x8xf32>
    %cst_28 = arith.constant dense<0.000000e+00> : vector<8xf32>
    %83 = vector.multi_reduction <add>, %82, %cst_28 [1] : vector<8x8xf32> to vector<8xf32>
    %84 = vector.shape_cast %83 : vector<8xf32> to vector<8x1xf32>
    %85 = tpu.reciprocal %84 {approx = true} : vector<8x1xf32> -> vector<8x1xf32>
    %86 = vector.broadcast %85 : vector<8x1xf32> to vector<8x8xf32>
    %87 = arith.mulf %82, %86 : vector<8x8xf32>
    %cst_29 = arith.constant dense<0.000000e+00> : vector<8x16xf32>
    %88 = tpu.matmul %87, %74, %cst_29 {dimension_numbers = #tpu.dot_dimension_numbers<[1], [0], [0], [1], [0, 0, 1, 1], [], []>} : vector<8x8xf32>, vector<8x16xf32>, vector<8x16xf32> -> vector<8x16xf32>
    %89 = vector.extract_strided_slice %3 {offsets = [16, 0], sizes = [16, 32], strides = [1, 1]} : vector<32x32xf32> to vector<16x32xf32>
    %cst_30 = arith.constant dense<0.000000e+00> : vector<8x32xf32>
    %90 = tpu.matmul %88, %89, %cst_30 {dimension_numbers = #tpu.dot_dimension_numbers<[1], [0], [0], [1], [0, 0, 1, 1], [], []>} : vector<8x16xf32>, vector<16x32xf32>, vector<8x32xf32> -> vector<8x32xf32>
    %91 = arith.addf %73, %90 : vector<8x32xf32>
    %92 = vector.broadcast %8 : vector<1x32xf32> to vector<8x32xf32>
    %93 = arith.addf %91, %92 : vector<8x32xf32>
    %94 = tpu.concatenate %55, %93 in 0 : vector<8x32xf32>, vector<8x32xf32> -> vector<16x32xf32>
    %95 = arith.addf %0, %94 : vector<16x32xf32>
    %cst_31 = arith.constant dense<0.000000e+00> : vector<16xf32>
    %96 = vector.multi_reduction <add>, %95, %cst_31 [1] : vector<16x32xf32> to vector<16xf32>
    %97 = vector.shape_cast %96 : vector<16xf32> to vector<16x1xf32>
    %cst_32 = arith.constant 3.200000e+01 : f32
    %98 = vector.broadcast %cst_32 : f32 to vector<16x1xf32>
    %99 = arith.divf %97, %98 : vector<16x1xf32>
    %100 = vector.broadcast %99 : vector<16x1xf32> to vector<16x32xf32>
    %101 = arith.subf %95, %100 : vector<16x32xf32>
    %102 = arith.mulf %101, %101 : vector<16x32xf32>
    %cst_33 = arith.constant dense<0.000000e+00> : vector<16xf32>
    %103 = vector.multi_reduction <add>, %102, %cst_33 [1] : vector<16x32xf32> to vector<16xf32>
    %104 = vector.shape_cast %103 : vector<16xf32> to vector<16x1xf32>
    %cst_34 = arith.constant 3.200000e+01 : f32
    %105 = vector.broadcast %cst_34 : f32 to vector<16x1xf32>
    %106 = arith.divf %104, %105 : vector<16x1xf32>
    %cst_35 = arith.constant 9.99999974E-6 : f32
    %107 = vector.broadcast %cst_35 : f32 to vector<16x1xf32>
    %108 = arith.addf %106, %107 : vector<16x1xf32>
    %109 = math.rsqrt %108 : vector<16x1xf32>
    %110 = vector.broadcast %109 : vector<16x1xf32> to vector<16x32xf32>
    %111 = arith.mulf %101, %110 : vector<16x32xf32>
    %112 = vector.broadcast %9 : vector<1x32xf32> to vector<16x32xf32>
    %113 = arith.mulf %111, %112 : vector<16x32xf32>
    %114 = vector.broadcast %10 : vector<1x32xf32> to vector<16x32xf32>
    %115 = arith.addf %113, %114 : vector<16x32xf32>
    %cst_36 = arith.constant dense<0.000000e+00> : vector<16x64xf32>
    %116 = tpu.matmul %115, %5, %cst_36 {dimension_numbers = #tpu.dot_dimension_numbers<[1], [0], [0], [1], [0, 0, 1, 1], [], []>} : vector<16x32xf32>, vector<32x64xf32>, vector<16x64xf32> -> vector<16x64xf32>
    %117 = vector.broadcast %11 : vector<1x64xf32> to vector<16x64xf32>
    %118 = arith.addf %116, %117 : vector<16x64xf32>
    %cst_37 = arith.constant 0.000000e+00 : f32
    %119 = vector.broadcast %cst_37 : f32 to vector<16x64xf32>
    %120 = arith.maximumf %118, %119 : vector<16x64xf32>
    %cst_38 = arith.constant dense<0.000000e+00> : vector<16x32xf32>
    %121 = tpu.matmul %120, %4, %cst_38 {dimension_numbers = #tpu.dot_dimension_numbers<[1], [0], [0], [1], [0, 0, 1, 1], [], []>} : vector<16x64xf32>, vector<64x32xf32>, vector<16x32xf32> -> vector<16x32xf32>
    %122 = vector.broadcast %12 : vector<1x32xf32> to vector<16x32xf32>
    %123 = arith.addf %121, %122 : vector<16x32xf32>
    %124 = arith.addf %115, %123 : vector<16x32xf32>
    %cst_39 = arith.constant dense<0.000000e+00> : vector<16xf32>
    %125 = vector.multi_reduction <add>, %124, %cst_39 [1] : vector<16x32xf32> to vector<16xf32>
    %126 = vector.shape_cast %125 : vector<16xf32> to vector<16x1xf32>
    %cst_40 = arith.constant 3.200000e+01 : f32
    %127 = vector.broadcast %cst_40 : f32 to vector<16x1xf32>
    %128 = arith.divf %126, %127 : vector<16x1xf32>
    %129 = vector.broadcast %128 : vector<16x1xf32> to vector<16x32xf32>
    %130 = arith.subf %124, %129 : vector<16x32xf32>
    %131 = arith.mulf %130, %130 : vector<16x32xf32>
    %cst_41 = arith.constant dense<0.000000e+00> : vector<16xf32>
    %132 = vector.multi_reduction <add>, %131, %cst_41 [1] : vector<16x32xf32> to vector<16xf32>
    %133 = vector.shape_cast %132 : vector<16xf32> to vector<16x1xf32>
    %cst_42 = arith.constant 3.200000e+01 : f32
    %134 = vector.broadcast %cst_42 : f32 to vector<16x1xf32>
    %135 = arith.divf %133, %134 : vector<16x1xf32>
    %cst_43 = arith.constant 9.99999974E-6 : f32
    %136 = vector.broadcast %cst_43 : f32 to vector<16x1xf32>
    %137 = arith.addf %135, %136 : vector<16x1xf32>
    %138 = math.rsqrt %137 : vector<16x1xf32>
    %139 = vector.broadcast %138 : vector<16x1xf32> to vector<16x32xf32>
    %140 = arith.mulf %130, %139 : vector<16x32xf32>
    %141 = vector.broadcast %13 : vector<1x32xf32> to vector<16x32xf32>
    %142 = arith.mulf %140, %141 : vector<16x32xf32>
    %143 = vector.broadcast %14 : vector<1x32xf32> to vector<16x32xf32>
    %144 = arith.addf %142, %143 : vector<16x32xf32>
    %c0_44 = arith.constant 0 : index
    %c0_45 = arith.constant 0 : index
    %145 = vector.load %arg4[%c0_44, %c0_45] : memref<16x32xf32, #tpu.memory_space<vmem>>, vector<16x32xf32>
    tpu.vector_store %arg4[%c0_44, %c0_45], %144 {strides = array<i32>} : memref<16x32xf32, #tpu.memory_space<vmem>>, vector<16x32xf32>,
    return
  }
}

</mosaic_0001>

<llo_original>
// kernel: tpu_custom_call.1
$region0: #{tpu_custom_call.1}
  #allocation0 [shape = 'u32[]', space=smem, size = 0x4, offset = 0x4, fixed_abs, tag = 'smem constant byte address 0x4 - core index']
  #allocation1 [shape = 'u32[144,128]{1,0:T(1,128)}', space=vmem, size = 0x12000, scoped, tag = 'internal scratch']
  %s0 = inlined_call_operand.vmem [shape: f32[16,32], index: 0, kind: input, shape index: {}]
  %s1 = inlined_call_operand.vmem [shape: f32[128,32], index: 1, kind: input, shape index: {}]
  %s2 = inlined_call_operand.vmem [shape: f32[32,64], index: 2, kind: input, shape index: {}]
  %s3 = inlined_call_operand.vmem [shape: f32[8,64], index: 3, kind: input, shape index: {}]
  %s4 = inlined_call_operand.hbm [shape: f32[16,32], index: 4, kind: output, shape index: {}]
  %s5 = sld [smem:[#allocation0]]
  $region26: #{tpu_custom_call.1} parent=0
    _
  %s7 = ssub.s32 1, %s5
  %s8 = scalar_select 0, %s7, %s5
  $region1: #{tpu_custom_call.1} parent=0
    #allocation2 [shape = 'u8[8192]{0}', space=vmem, size = 0x2000, scoped, tag = 'output window, operand 0, single buffered']
    #allocation3 [shape = 's32[1]{0}', space=sflag, size = 0x4, scoped, tag = 'scoped memory for tpu_custom_call.1']
    %9 = vsyncpa [#allocation3], 0
    // Predicated region
    $region2: #{tpu_custom_call.1} parent=1 // pred_check
      _
    $region3: #{tpu_custom_call.1} parent=1 // pred_check_branch
      %11 = sbr.rel (0) target = $region5
    $region4: #{tpu_custom_call.1} parent=1 // pred_region
      _
    $region5: #{tpu_custom_call.1} parent=1 // pred_fallthru
      _
    // Predicated region
    $region6: #{tpu_custom_call.1} parent=1 // pred_check
      _
    $region7: #{tpu_custom_call.1} parent=1 // pred_check_branch
      %13 = sbr.rel (0) target = $region9
    $region8: #{tpu_custom_call.1} parent=1 // pred_region
      _
    $region9: #{tpu_custom_call.1} parent=1 // pred_fallthru
      _
    // Predicated region
    $region10: #{tpu_custom_call.1} parent=1 // pred_check
      _
    $region11: #{tpu_custom_call.1} parent=1 // pred_check_branch
      %15 = sbr.rel (0) target = $region13
    $region12: #{tpu_custom_call.1} parent=1 // pred_region
      _
    $region13: #{tpu_custom_call.1} parent=1 // pred_fallthru
      _
    // Predicated region
    $region14: #{tpu_custom_call.1} parent=1 // pred_check
      _
    $region15: #{tpu_custom_call.1} parent=1 // pred_check_branch
      %17 = sbr.rel (0) target = $region17
    $region16: #{tpu_custom_call.1} parent=1 // pred_region
      _
    $region17: #{tpu_custom_call.1} parent=1 // pred_fallthru
      _
    %v18 = vld [vmem:[%s0] sm:$0xff]
    %v19 = vld [vmem:[%s0 + $0x8] sm:$0xff]
    %v20 = vld [vmem:[%s1] sm:$0xff]
    %v21 = vld [vmem:[%s1 + $0x8] sm:$0xff]
    %v22 = vld [vmem:[%s1 + $0x10] sm:$0xff]
    %v23 = vld [vmem:[%s1 + $0x18] sm:$0xff]
    %v24 = vld [vmem:[%s1 + $0x20] sm:$0xff]
    %v25 = vld [vmem:[%s1 + $0x28] sm:$0xff]
    %v26 = vld [vmem:[%s1 + $0x30] sm:$0xff]
    %v27 = vld [vmem:[%s1 + $0x38] sm:$0xff]
    %v28 = vld [vmem:[%s1 + $0x40] sm:$0xff]
    %v29 = vld [vmem:[%s1 + $0x48] sm:$0xff]
    %v30 = vld [vmem:[%s1 + $0x50] sm:$0xff]
    %v31 = vld [vmem:[%s1 + $0x58] sm:$0xff]
    %v32 = vld [vmem:[%s1 + $0x60] sm:$0xff]
    %v33 = vld [vmem:[%s1 + $0x68] sm:$0xff]
    %v34 = vld [vmem:[%s1 + $0x70] sm:$0xff]
    %v35 = vld [vmem:[%s1 + $0x78] sm:$0xff]
    %v36 = vld [vmem:[%s2] sm:$0xff]
    %v37 = vld [vmem:[%s2 + $0x8] sm:$0xff]
    %v38 = vld [vmem:[%s2 + $0x10] sm:$0xff]
    %v39 = vld [vmem:[%s2 + $0x18] sm:$0xff]
    %v40 = vld [vmem:[%s3] sm:$0xff]
    %v41 = vlaneseq
    %v42 = vshrl.u32 %v41, 7
    %v43 = vsub.s32 0, %v42
    %v44 = vrot.slane %v40, %v43
    %vm45 = vcmask 261120
    %v47 = vsel %vm45, %v18, 0
    %v50 = vsel %vm45, %v19, 0
    %52 = vmatprep.subr.mxu0 0.0
    %53 = vmatpush1.msra.mxu0 0.0
    %54 = vmatprep.subr.mxu0 0.0
    %55 = vmatpush1.msra.mxu0 0.0
    %56 = vmatprep.subr.mxu0 0.0
    %57 = vmatpush1.msra.mxu0 0.0
    %58 = vmatprep.subr.mxu0 0.0
    %59 = vmatpush1.msra.mxu0 0.0
    %60 = vmatprep.subr.mxu0 0.0
    %61 = vmatpush1.msra.mxu0 0.0
    %62 = vmatprep.subr.mxu0 0.0
    %63 = vmatpush1.msra.mxu0 0.0
    %64 = vmatprep.subr.mxu0 0.0
    %65 = vmatpush1.msra.mxu0 0.0
    %66 = vmatprep.subr.mxu0 0.0
    %67 = vmatpush1.msra.mxu0 0.0
    %68 = vmatprep.subr.mxu0 0.0
    %69 = vmatpush1.msra.mxu0 0.0
    %70 = vmatprep.subr.mxu0 0.0
    %71 = vmatpush1.msra.mxu0 0.0
    %72 = vmatprep.subr.mxu0 0.0
    %73 = vmatpush1.msra.mxu0 0.0
    %74 = vmatprep.subr.mxu0 0.0
    %75 = vmatpush1.msra.mxu0 0.0
    %76 = vmatprep.subr.mxu0 0.0
    %77 = vmatpush1.msra.mxu0 %v23
    %78 = vmatprep.subr.mxu0 0.0
    %79 = vmatpush1.msra.mxu0 %v22
    %80 = vmatprep.subr.mxu0 0.0
    %81 = vmatpush1.msra.mxu0 %v21
    %82 = vmatprep.subr.mxu0 0.0
    %83 = vmatpush1.msra.mxu0 %v20
    %84 = vmatprep.subr.mxu0 0.0
    %85 = vmatpush2.msra.mxu0 0.0
    %86 = vmatprep.subr.mxu0 0.0
    %87 = vmatpush2.msra.mxu0 0.0
    %88 = vmatprep.subr.mxu0 0.0
    %89 = vmatpush2.msra.mxu0 0.0
    %90 = vmatprep.subr.mxu0 0.0
    %91 = vmatpush2.msra.mxu0 0.0
    %92 = vmatprep.subr.mxu0 0.0
    %93 = vmatpush2.msra.mxu0 0.0
    %94 = vmatprep.subr.mxu0 0.0
    %95 = vmatpush2.msra.mxu0 0.0
    %96 = vmatprep.subr.mxu0 0.0
    %97 = vmatpush2.msra.mxu0 0.0
    %98 = vmatprep.subr.mxu0 0.0
    %99 = vmatpush2.msra.mxu0 0.0
    %100 = vmatprep.subr.mxu0 0.0
    %101 = vmatpush2.msra.mxu0 0.0
    %102 = vmatprep.subr.mxu0 0.0
    %103 = vmatpush2.msra.mxu0 0.0
    %104 = vmatprep.subr.mxu0 0.0
    %105 = vmatpush2.msra.mxu0 0.0
    %106 = vmatprep.subr.mxu0 0.0
    %107 = vmatpush2.msra.mxu0 0.0
    %108 = vmatprep.subr.mxu0 0.0
    %109 = vmatpush2.msra.mxu0 0.0
    %110 = vmatprep.subr.mxu0 0.0
    %111 = vmatpush2.msra.mxu0 0.0
    %112 = vmatprep.subr.mxu0 0.0
    %113 = vmatpush2.msra.mxu0 0.0
    %114 = vmatprep.subr.mxu0 0.0
    %115 = vmatpush2.msra.mxu0 0.0
    %116 = vmatprep.mubr.f32.mxu0 0.0
    %117 = vmatmul.mubr.f32.gmra.mxu0 %v47
    %v118 = vpop.f32.mrf.mxu0
    %v119 = vadd.f32 %v44, %v118
    %v120 = vpop.f32.mrf.mxu0
    %121 = vmatprep.mubr.f32.mxu0 0.0
    %122 = vmatmul.mubr.f32.gmra.mxu0 %v50
    %v123 = vpop.f32.mrf.mxu0
    %v124 = vadd.f32 %v44, %v123
    %v125 = vpop.f32.mrf.mxu0
    %126 = vdwg.mxu0
    %vm127 = vcmask 130048
    %v129 = vsel %vm127, %v119, 0
    %131 = vmatprep.subr.mxu0 0.0
    %132 = vmatpush1.xpose.msra.mxu0 0.0
    %133 = vmatprep.subr.mxu0 0.0
    %134 = vmatpush1.xpose.msra.mxu0 0.0
    %135 = vmatprep.subr.mxu0 0.0
    %136 = vmatpush1.xpose.msra.mxu0 0.0
    %137 = vmatprep.subr.mxu0 0.0
    %138 = vmatpush1.xpose.msra.mxu0 0.0
    %139 = vmatprep.subr.mxu0 0.0
    %140 = vmatpush1.xpose.msra.mxu0 0.0
    %141 = vmatprep.subr.mxu0 0.0
    %142 = vmatpush1.xpose.msra.mxu0 0.0
    %143 = vmatprep.subr.mxu0 0.0
    %144 = vmatpush1.xpose.msra.mxu0 0.0
    %145 = vmatprep.subr.mxu0 0.0
    %146 = vmatpush1.xpose.msra.mxu0 0.0
    %147 = vmatprep.subr.mxu0 0.0
    %148 = vmatpush1.xpose.msra.mxu0 0.0
    %149 = vmatprep.subr.mxu0 0.0
    %150 = vmatpush1.xpose.msra.mxu0 0.0
    %151 = vmatprep.subr.mxu0 0.0
    %152 = vmatpush1.xpose.msra.mxu0 0.0
    %153 = vmatprep.subr.mxu0 0.0
    %154 = vmatpush1.xpose.msra.mxu0 0.0
    %155 = vmatprep.subr.mxu0 0.0
    %156 = vmatpush1.xpose.msra.mxu0 0.0
    %157 = vmatprep.subr.mxu0 0.0
    %158 = vmatpush1.xpose.msra.mxu0 0.0
    %159 = vmatprep.subr.mxu0 0.0
    %160 = vmatpush1.xpose.msra.mxu0 0.0
    %161 = vmatprep.subr.mxu0 0.0
    %162 = vmatpush1.xpose.msra.mxu0 %v129
    %163 = vmatprep.subr.mxu0 0.0
    %164 = vmatpush2.xpose.msra.mxu0 0.0
    %165 = vmatprep.subr.mxu0 0.0
    %166 = vmatpush2.xpose.msra.mxu0 0.0
    %167 = vmatprep.subr.mxu0 0.0
    %168 = vmatpush2.xpose.msra.mxu0 0.0
    %169 = vmatprep.subr.mxu0 0.0
    %170 = vmatpush2.xpose.msra.mxu0 0.0
    %171 = vmatprep.subr.mxu0 0.0
    %172 = vmatpush2.xpose.msra.mxu0 0.0
    %173 = vmatprep.subr.mxu0 0.0
    %174 = vmatpush2.xpose.msra.mxu0 0.0
    %175 = vmatprep.subr.mxu0 0.0
    %176 = vmatpush2.xpose.msra.mxu0 0.0
    %177 = vmatprep.subr.mxu0 0.0
    %178 = vmatpush2.xpose.msra.mxu0 0.0
    %179 = vmatprep.subr.mxu0 0.0
    %180 = vmatpush2.xpose.msra.mxu0 0.0
    %181 = vmatprep.subr.mxu0 0.0
    %182 = vmatpush2.xpose.msra.mxu0 0.0
    %183 = vmatprep.subr.mxu0 0.0
    %184 = vmatpush2.xpose.msra.mxu0 0.0
    %185 = vmatprep.subr.mxu0 0.0
    %186 = vmatpush2.xpose.msra.mxu0 0.0
    %187 = vmatprep.subr.mxu0 0.0
    %188 = vmatpush2.xpose.msra.mxu0 0.0
    %189 = vmatprep.subr.mxu0 0.0
    %190 = vmatpush2.xpose.msra.mxu0 0.0
    %191 = vmatprep.subr.mxu0 0.0
    %192 = vmatpush2.xpose.msra.mxu0 0.0
    %193 = vmatprep.subr.mxu0 0.0
    %194 = vmatpush2.xpose.msra.mxu0 0.0
    %195 = vmatprep.mubr.f32.mxu0 0.0
    %196 = vmatmul.mubr.f32.gmra.mxu0 %v129
    %v197 = vpop.f32.mrf.mxu0
    %v198 = vadd.f32 0.0, %v197
    %v199 = vpop.f32.mrf.mxu0
    %200 = vdwg.mxu0
    %v201 = vmul.f32 %v198, 0.25
    %vm202 = vcmask 64512
    %v203 = vsel %vm202, %v201, -inf
    %204 = vmax.xlane.f32.xlu0 %v203
    %v205 = vpop.xlane.xlu0 %204
    %v206 = vsub.f32 %v201, %v205
    %v207 = vmul.f32 %v206, 1.442695
    %v208 = vpow.pop %v207
    %v209 = vsel %vm202, %v208, 0.0
    %210 = vadd.xlane.f32.xlu0 %v209
    %v211 = vpop.xlane.xlu0 %210
    %v212 = vrcp.pop %v211
    %v213 = vmul.f32 %v208, %v212
    %v215 = vsel %vm202, %v213, 0
    %217 = vmatprep.subr.mxu0 0.0
    %218 = vmatpush1.msra.mxu0 0.0
    %219 = vmatprep.subr.mxu0 0.0
    %220 = vmatpush1.msra.mxu0 0.0
    %221 = vmatprep.subr.mxu0 0.0
    %222 = vmatpush1.msra.mxu0 0.0
    %223 = vmatprep.subr.mxu0 0.0
    %224 = vmatpush1.msra.mxu0 0.0
    %225 = vmatprep.subr.mxu0 0.0
    %226 = vmatpush1.msra.mxu0 0.0
    %227 = vmatprep.subr.mxu0 0.0
    %228 = vmatpush1.msra.mxu0 0.0
    %229 = vmatprep.subr.mxu0 0.0
    %230 = vmatpush1.msra.mxu0 0.0
    %231 = vmatprep.subr.mxu0 0.0
    %232 = vmatpush1.msra.mxu0 0.0
    %233 = vmatprep.subr.mxu0 0.0
    %234 = vmatpush1.msra.mxu0 0.0
    %235 = vmatprep.subr.mxu0 0.0
    %236 = vmatpush1.msra.mxu0 0.0
    %237 = vmatprep.subr.mxu0 0.0
    %238 = vmatpush1.msra.mxu0 0.0
    %239 = vmatprep.subr.mxu0 0.0
    %240 = vmatpush1.msra.mxu0 0.0
    %241 = vmatprep.subr.mxu0 0.0
    %242 = vmatpush1.msra.mxu0 0.0
    %243 = vmatprep.subr.mxu0 0.0
    %244 = vmatpush1.msra.mxu0 0.0
    %245 = vmatprep.subr.mxu0 0.0
    %246 = vmatpush1.msra.mxu0 0.0
    %247 = vmatprep.subr.mxu0 0.0
    %248 = vmatpush1.msra.mxu0 %v119
    %249 = vmatprep.subr.mxu0 0.0
    %250 = vmatpush2.msra.mxu0 0.0
    %251 = vmatprep.subr.mxu0 0.0
    %252 = vmatpush2.msra.mxu0 0.0
    %253 = vmatprep.subr.mxu0 0.0
    %254 = vmatpush2.msra.mxu0 0.0
    %255 = vmatprep.subr.mxu0 0.0
    %256 = vmatpush2.msra.mxu0 0.0
    %257 = vmatprep.subr.mxu0 0.0
    %258 = vmatpush2.msra.mxu0 0.0
    %259 = vmatprep.subr.mxu0 0.0
    %260 = vmatpush2.msra.mxu0 0.0
    %261 = vmatprep.subr.mxu0 0.0
    %262 = vmatpush2.msra.mxu0 0.0
    %263 = vmatprep.subr.mxu0 0.0
    %264 = vmatpush2.msra.mxu0 0.0
    %265 = vmatprep.subr.mxu0 0.0
    %266 = vmatpush2.msra.mxu0 0.0
    %267 = vmatprep.subr.mxu0 0.0
    %268 = vmatpush2.msra.mxu0 0.0
    %269 = vmatprep.subr.mxu0 0.0
    %270 = vmatpush2.msra.mxu0 0.0
    %271 = vmatprep.subr.mxu0 0.0
    %272 = vmatpush2.msra.mxu0 0.0
    %273 = vmatprep.subr.mxu0 0.0
    %274 = vmatpush2.msra.mxu0 0.0
    %275 = vmatprep.subr.mxu0 0.0
    %276 = vmatpush2.msra.mxu0 0.0
    %277 = vmatprep.subr.mxu0 0.0
    %278 = vmatpush2.msra.mxu0 0.0
    %279 = vmatprep.subr.mxu0 0.0
    %280 = vmatpush2.msra.mxu0 0.0
    %281 = vmatprep.mubr.f32.mxu0 0.0
    %282 = vmatmul.mubr.f32.gmra.mxu0 %v215
    %v283 = vpop.f32.mrf.mxu0
    %v284 = vadd.f32 0.0, %v283
    %v285 = vpop.f32.mrf.mxu0
    %286 = vdwg.mxu0
    %287 = vrot.lane.b32.xlu0 %v119, 112
    %v288 = vpop.permute.xlu0 %287
    %v289 = vsel %vm127, %v288, 0
    %291 = vmatprep.subr.mxu0 0.0
    %292 = vmatpush1.xpose.msra.mxu0 0.0
    %293 = vmatprep.subr.mxu0 0.0
    %294 = vmatpush1.xpose.msra.mxu0 0.0
    %295 = vmatprep.subr.mxu0 0.0
    %296 = vmatpush1.xpose.msra.mxu0 0.0
    %297 = vmatprep.subr.mxu0 0.0
    %298 = vmatpush1.xpose.msra.mxu0 0.0
    %299 = vmatprep.subr.mxu0 0.0
    %300 = vmatpush1.xpose.msra.mxu0 0.0
    %301 = vmatprep.subr.mxu0 0.0
    %302 = vmatpush1.xpose.msra.mxu0 0.0
    %303 = vmatprep.subr.mxu0 0.0
    %304 = vmatpush1.xpose.msra.mxu0 0.0
    %305 = vmatprep.subr.mxu0 0.0
    %306 = vmatpush1.xpose.msra.mxu0 0.0
    %307 = vmatprep.subr.mxu0 0.0
    %308 = vmatpush1.xpose.msra.mxu0 0.0
    %309 = vmatprep.subr.mxu0 0.0
    %310 = vmatpush1.xpose.msra.mxu0 0.0
    %311 = vmatprep.subr.mxu0 0.0
    %312 = vmatpush1.xpose.msra.mxu0 0.0
    %313 = vmatprep.subr.mxu0 0.0
    %314 = vmatpush1.xpose.msra.mxu0 0.0
    %315 = vmatprep.subr.mxu0 0.0
    %316 = vmatpush1.xpose.msra.mxu0 0.0
    %317 = vmatprep.subr.mxu0 0.0
    %318 = vmatpush1.xpose.msra.mxu0 0.0
    %319 = vmatprep.subr.mxu0 0.0
    %320 = vmatpush1.xpose.msra.mxu0 0.0
    %321 = vmatprep.subr.mxu0 0.0
    %322 = vmatpush1.xpose.msra.mxu0 %v289
    %323 = vmatprep.subr.mxu0 0.0
    %324 = vmatpush2.xpose.msra.mxu0 0.0
    %325 = vmatprep.subr.mxu0 0.0
    %326 = vmatpush2.xpose.msra.mxu0 0.0
    %327 = vmatprep.subr.mxu0 0.0
    %328 = vmatpush2.xpose.msra.mxu0 0.0
    %329 = vmatprep.subr.mxu0 0.0
    %330 = vmatpush2.xpose.msra.mxu0 0.0
    %331 = vmatprep.subr.mxu0 0.0
    %332 = vmatpush2.xpose.msra.mxu0 0.0
    %333 = vmatprep.subr.mxu0 0.0
    %334 = vmatpush2.xpose.msra.mxu0 0.0
    %335 = vmatprep.subr.mxu0 0.0
    %336 = vmatpush2.xpose.msra.mxu0 0.0
    %337 = vmatprep.subr.mxu0 0.0
    %338 = vmatpush2.xpose.msra.mxu0 0.0
    %339 = vmatprep.subr.mxu0 0.0
    %340 = vmatpush2.xpose.msra.mxu0 0.0
    %341 = vmatprep.subr.mxu0 0.0
    %342 = vmatpush2.xpose.msra.mxu0 0.0
    %343 = vmatprep.subr.mxu0 0.0
    %344 = vmatpush2.xpose.msra.mxu0 0.0
    %345 = vmatprep.subr.mxu0 0.0
    %346 = vmatpush2.xpose.msra.mxu0 0.0
    %347 = vmatprep.subr.mxu0 0.0
    %348 = vmatpush2.xpose.msra.mxu0 0.0
    %349 = vmatprep.subr.mxu0 0.0
    %350 = vmatpush2.xpose.msra.mxu0 0.0
    %351 = vmatprep.subr.mxu0 0.0
    %352 = vmatpush2.xpose.msra.mxu0 0.0
    %353 = vmatprep.subr.mxu0 0.0
    %354 = vmatpush2.xpose.msra.mxu0 0.0
    %355 = vmatprep.mubr.f32.mxu0 0.0
    %356 = vmatmul.mubr.f32.gmra.mxu0 %v289
    %v357 = vpop.f32.mrf.mxu0
    %v358 = vadd.f32 0.0, %v357
    %v359 = vpop.f32.mrf.mxu0
    %360 = vdwg.mxu0
    %v361 = vmul.f32 %v358, 0.25
    %v362 = vsel %vm202, %v361, -inf
    %363 = vmax.xlane.f32.xlu0 %v362
    %v364 = vpop.xlane.xlu0 %363
    %v365 = vsub.f32 %v361, %v364
    %v366 = vmul.f32 %v365, 1.442695
    %v367 = vpow.pop %v366
    %v368 = vsel %vm202, %v367, 0.0
    %369 = vadd.xlane.f32.xlu0 %v368
    %v370 = vpop.xlane.xlu0 %369
    %v371 = vrcp.pop %v370
    %v372 = vmul.f32 %v367, %v371
    %v375 = vsel %vm202, %v372, 0
    %377 = vmatprep.subr.mxu0 0.0
    %378 = vmatpush1.msra.mxu0 0.0
    %379 = vmatprep.subr.mxu0 0.0
    %380 = vmatpush1.msra.mxu0 0.0
    %381 = vmatprep.subr.mxu0 0.0
    %382 = vmatpush1.msra.mxu0 0.0
    %383 = vmatprep.subr.mxu0 0.0
    %384 = vmatpush1.msra.mxu0 0.0
    %385 = vmatprep.subr.mxu0 0.0
    %386 = vmatpush1.msra.mxu0 0.0
    %387 = vmatprep.subr.mxu0 0.0
    %388 = vmatpush1.msra.mxu0 0.0
    %389 = vmatprep.subr.mxu0 0.0
    %390 = vmatpush1.msra.mxu0 0.0
    %391 = vmatprep.subr.mxu0 0.0
    %392 = vmatpush1.msra.mxu0 0.0
    %393 = vmatprep.subr.mxu0 0.0
    %394 = vmatpush1.msra.mxu0 0.0
    %395 = vmatprep.subr.mxu0 0.0
    %396 = vmatpush1.msra.mxu0 0.0
    %397 = vmatprep.subr.mxu0 0.0
    %398 = vmatpush1.msra.mxu0 0.0
    %399 = vmatprep.subr.mxu0 0.0
    %400 = vmatpush1.msra.mxu0 0.0
    %401 = vmatprep.subr.mxu0 0.0
    %402 = vmatpush1.msra.mxu0 0.0
    %403 = vmatprep.subr.mxu0 0.0
    %404 = vmatpush1.msra.mxu0 0.0
    %405 = vmatprep.subr.mxu0 0.0
    %406 = vmatpush1.msra.mxu0 0.0
    %407 = vmatprep.subr.mxu0 0.0
    %408 = vmatpush1.msra.mxu0 %v288
    %409 = vmatprep.subr.mxu0 0.0
    %410 = vmatpush2.msra.mxu0 0.0
    %411 = vmatprep.subr.mxu0 0.0
    %412 = vmatpush2.msra.mxu0 0.0
    %413 = vmatprep.subr.mxu0 0.0
    %414 = vmatpush2.msra.mxu0 0.0
    %415 = vmatprep.subr.mxu0 0.0
    %416 = vmatpush2.msra.mxu0 0.0
    %417 = vmatprep.subr.mxu0 0.0
    %418 = vmatpush2.msra.mxu0 0.0
    %419 = vmatprep.subr.mxu0 0.0
    %420 = vmatpush2.msra.mxu0 0.0
    %421 = vmatprep.subr.mxu0 0.0
    %422 = vmatpush2.msra.mxu0 0.0
    %423 = vmatprep.subr.mxu0 0.0
    %424 = vmatpush2.msra.mxu0 0.0
    %425 = vmatprep.subr.mxu0 0.0
    %426 = vmatpush2.msra.mxu0 0.0
    %427 = vmatprep.subr.mxu0 0.0
    %428 = vmatpush2.msra.mxu0 0.0
    %429 = vmatprep.subr.mxu0 0.0
    %430 = vmatpush2.msra.mxu0 0.0
    %431 = vmatprep.subr.mxu0 0.0
    %432 = vmatpush2.msra.mxu0 0.0
    %433 = vmatprep.subr.mxu0 0.0
    %434 = vmatpush2.msra.mxu0 0.0
    %435 = vmatprep.subr.mxu0 0.0
    %436 = vmatpush2.msra.mxu0 0.0
    %437 = vmatprep.subr.mxu0 0.0
    %438 = vmatpush2.msra.mxu0 0.0
    %439 = vmatprep.subr.mxu0 0.0
    %440 = vmatpush2.msra.mxu0 0.0
    %441 = vmatprep.mubr.f32.mxu0 0.0
    %442 = vmatmul.mubr.f32.gmra.mxu0 %v375
    %v443 = vpop.f32.mrf.mxu0
    %v444 = vadd.f32 0.0, %v443
    %v445 = vpop.f32.mrf.mxu0
    %446 = vdwg.mxu0
    %v448 = vsel %vm127, %v444, 0
    %450 = vmatprep.subr.mxu0 0.0
    %451 = vmatpush1.msra.mxu0 0.0
    %452 = vmatprep.subr.mxu0 0.0
    %453 = vmatpush1.msra.mxu0 0.0
    %454 = vmatprep.subr.mxu0 0.0
    %455 = vmatpush1.msra.mxu0 0.0
    %456 = vmatprep.subr.mxu0 0.0
    %457 = vmatpush1.msra.mxu0 0.0
    %458 = vmatprep.subr.mxu0 0.0
    %459 = vmatpush1.msra.mxu0 0.0
    %460 = vmatprep.subr.mxu0 0.0
    %461 = vmatpush1.msra.mxu0 0.0
    %462 = vmatprep.subr.mxu0 0.0
    %463 = vmatpush1.msra.mxu0 0.0
    %464 = vmatprep.subr.mxu0 0.0
    %465 = vmatpush1.msra.mxu0 0.0
    %466 = vmatprep.subr.mxu0 0.0
    %467 = vmatpush1.msra.mxu0 0.0
    %468 = vmatprep.subr.mxu0 0.0
    %469 = vmatpush1.msra.mxu0 0.0
    %470 = vmatprep.subr.mxu0 0.0
    %471 = vmatpush1.msra.mxu0 0.0
    %472 = vmatprep.subr.mxu0 0.0
    %473 = vmatpush1.msra.mxu0 0.0
    %474 = vmatprep.subr.mxu0 0.0
    %475 = vmatpush1.msra.mxu0 0.0
    %476 = vmatprep.subr.mxu0 0.0
    %477 = vmatpush1.msra.mxu0 0.0
    %478 = vmatprep.subr.mxu0 0.0
    %479 = vmatpush1.msra.mxu0 %v27
    %480 = vmatprep.subr.mxu0 0.0
    %481 = vmatpush1.msra.mxu0 %v26
    %482 = vmatprep.subr.mxu0 0.0
    %483 = vmatpush2.msra.mxu0 0.0
    %484 = vmatprep.subr.mxu0 0.0
    %485 = vmatpush2.msra.mxu0 0.0
    %486 = vmatprep.subr.mxu0 0.0
    %487 = vmatpush2.msra.mxu0 0.0
    %488 = vmatprep.subr.mxu0 0.0
    %489 = vmatpush2.msra.mxu0 0.0
    %490 = vmatprep.subr.mxu0 0.0
    %491 = vmatpush2.msra.mxu0 0.0
    %492 = vmatprep.subr.mxu0 0.0
    %493 = vmatpush2.msra.mxu0 0.0
    %494 = vmatprep.subr.mxu0 0.0
    %495 = vmatpush2.msra.mxu0 0.0
    %496 = vmatprep.subr.mxu0 0.0
    %497 = vmatpush2.msra.mxu0 0.0
    %498 = vmatprep.subr.mxu0 0.0
    %499 = vmatpush2.msra.mxu0 0.0
    %500 = vmatprep.subr.mxu0 0.0
    %501 = vmatpush2.msra.mxu0 0.0
    %502 = vmatprep.subr.mxu0 0.0
    %503 = vmatpush2.msra.mxu0 0.0
    %504 = vmatprep.subr.mxu0 0.0
    %505 = vmatpush2.msra.mxu0 0.0
    %506 = vmatprep.subr.mxu0 0.0
    %507 = vmatpush2.msra.mxu0 0.0
    %508 = vmatprep.subr.mxu0 0.0
    %509 = vmatpush2.msra.mxu0 0.0
    %510 = vmatprep.subr.mxu0 0.0
    %511 = vmatpush2.msra.mxu0 0.0
    %512 = vmatprep.subr.mxu0 0.0
    %513 = vmatpush2.msra.mxu0 0.0
    %514 = vmatprep.mubr.f32.mxu0 0.0
    %515 = vmatmul.mubr.f32.gmra.mxu0 %v448
    %v516 = vpop.f32.mrf.mxu0
    %v517 = vadd.f32 0.0, %v516
    %v518 = vpop.f32.mrf.mxu0
    %519 = vdwg.mxu0
    %v521 = vsel %vm127, %v284, 0
    %523 = vmatprep.subr.mxu0 0.0
    %524 = vmatpush1.msra.mxu0 0.0
    %525 = vmatprep.subr.mxu0 0.0
    %526 = vmatpush1.msra.mxu0 0.0
    %527 = vmatprep.subr.mxu0 0.0
    %528 = vmatpush1.msra.mxu0 0.0
    %529 = vmatprep.subr.mxu0 0.0
    %530 = vmatpush1.msra.mxu0 0.0
    %531 = vmatprep.subr.mxu0 0.0
    %532 = vmatpush1.msra.mxu0 0.0
    %533 = vmatprep.subr.mxu0 0.0
    %534 = vmatpush1.msra.mxu0 0.0
    %535 = vmatprep.subr.mxu0 0.0
    %536 = vmatpush1.msra.mxu0 0.0
    %537 = vmatprep.subr.mxu0 0.0
    %538 = vmatpush1.msra.mxu0 0.0
    %539 = vmatprep.subr.mxu0 0.0
    %540 = vmatpush1.msra.mxu0 0.0
    %541 = vmatprep.subr.mxu0 0.0
    %542 = vmatpush1.msra.mxu0 0.0
    %543 = vmatprep.subr.mxu0 0.0
    %544 = vmatpush1.msra.mxu0 0.0
    %545 = vmatprep.subr.mxu0 0.0
    %546 = vmatpush1.msra.mxu0 0.0
    %547 = vmatprep.subr.mxu0 0.0
    %548 = vmatpush1.msra.mxu0 0.0
    %549 = vmatprep.subr.mxu0 0.0
    %550 = vmatpush1.msra.mxu0 0.0
    %551 = vmatprep.subr.mxu0 0.0
    %552 = vmatpush1.msra.mxu0 %v25
    %553 = vmatprep.subr.mxu0 0.0
    %554 = vmatpush1.msra.mxu0 %v24
    %555 = vmatprep.subr.mxu0 0.0
    %556 = vmatpush2.msra.mxu0 0.0
    %557 = vmatprep.subr.mxu0 0.0
    %558 = vmatpush2.msra.mxu0 0.0
    %559 = vmatprep.subr.mxu0 0.0
    %560 = vmatpush2.msra.mxu0 0.0
    %561 = vmatprep.subr.mxu0 0.0
    %562 = vmatpush2.msra.mxu0 0.0
    %563 = vmatprep.subr.mxu0 0.0
    %564 = vmatpush2.msra.mxu0 0.0
    %565 = vmatprep.subr.mxu0 0.0
    %566 = vmatpush2.msra.mxu0 0.0
    %567 = vmatprep.subr.mxu0 0.0
    %568 = vmatpush2.msra.mxu0 0.0
    %569 = vmatprep.subr.mxu0 0.0
    %570 = vmatpush2.msra.mxu0 0.0
    %571 = vmatprep.subr.mxu0 0.0
    %572 = vmatpush2.msra.mxu0 0.0
    %573 = vmatprep.subr.mxu0 0.0
    %574 = vmatpush2.msra.mxu0 0.0
    %575 = vmatprep.subr.mxu0 0.0
    %576 = vmatpush2.msra.mxu0 0.0
    %577 = vmatprep.subr.mxu0 0.0
    %578 = vmatpush2.msra.mxu0 0.0
    %579 = vmatprep.subr.mxu0 0.0
    %580 = vmatpush2.msra.mxu0 0.0
    %581 = vmatprep.subr.mxu0 0.0
    %582 = vmatpush2.msra.mxu0 0.0
    %583 = vmatprep.subr.mxu0 0.0
    %584 = vmatpush2.msra.mxu0 0.0
    %585 = vmatprep.subr.mxu0 0.0
    %586 = vmatpush2.msra.mxu0 0.0
    %587 = vmatprep.mubr.f32.mxu0 0.0
    %588 = vmatmul.mubr.f32.gmra.mxu0 %v521
    %v589 = vpop.f32.mrf.mxu0
    %v590 = vadd.f32 %v517, %v589
    %v591 = vpop.f32.mrf.mxu0
    %592 = vdwg.mxu0
    %v593 = vlaneseq
    %v594 = vshrl.u32 %v593, 7
    %v595 = vsub.s32 1, %v594
    %v596 = vrot.slane %v40, %v595
    %v597 = vadd.f32 %v590, %v596
    %v599 = vsel %vm127, %v124, 0
    %601 = vmatprep.subr.mxu0 0.0
    %602 = vmatpush1.xpose.msra.mxu0 0.0
    %603 = vmatprep.subr.mxu0 0.0
    %604 = vmatpush1.xpose.msra.mxu0 0.0
    %605 = vmatprep.subr.mxu0 0.0
    %606 = vmatpush1.xpose.msra.mxu0 0.0
    %607 = vmatprep.subr.mxu0 0.0
    %608 = vmatpush1.xpose.msra.mxu0 0.0
    %609 = vmatprep.subr.mxu0 0.0
    %610 = vmatpush1.xpose.msra.mxu0 0.0
    %611 = vmatprep.subr.mxu0 0.0
    %612 = vmatpush1.xpose.msra.mxu0 0.0
    %613 = vmatprep.subr.mxu0 0.0
    %614 = vmatpush1.xpose.msra.mxu0 0.0
    %615 = vmatprep.subr.mxu0 0.0
    %616 = vmatpush1.xpose.msra.mxu0 0.0
    %617 = vmatprep.subr.mxu0 0.0
    %618 = vmatpush1.xpose.msra.mxu0 0.0
    %619 = vmatprep.subr.mxu0 0.0
    %620 = vmatpush1.xpose.msra.mxu0 0.0
    %621 = vmatprep.subr.mxu0 0.0
    %622 = vmatpush1.xpose.msra.mxu0 0.0
    %623 = vmatprep.subr.mxu0 0.0
    %624 = vmatpush1.xpose.msra.mxu0 0.0
    %625 = vmatprep.subr.mxu0 0.0
    %626 = vmatpush1.xpose.msra.mxu0 0.0
    %627 = vmatprep.subr.mxu0 0.0
    %628 = vmatpush1.xpose.msra.mxu0 0.0
    %629 = vmatprep.subr.mxu0 0.0
    %630 = vmatpush1.xpose.msra.mxu0 0.0
    %631 = vmatprep.subr.mxu0 0.0
    %632 = vmatpush1.xpose.msra.mxu0 %v599
    %633 = vmatprep.subr.mxu0 0.0
    %634 = vmatpush2.xpose.msra.mxu0 0.0
    %635 = vmatprep.subr.mxu0 0.0
    %636 = vmatpush2.xpose.msra.mxu0 0.0
    %637 = vmatprep.subr.mxu0 0.0
    %638 = vmatpush2.xpose.msra.mxu0 0.0
    %639 = vmatprep.subr.mxu0 0.0
    %640 = vmatpush2.xpose.msra.mxu0 0.0
    %641 = vmatprep.subr.mxu0 0.0
    %642 = vmatpush2.xpose.msra.mxu0 0.0
    %643 = vmatprep.subr.mxu0 0.0
    %644 = vmatpush2.xpose.msra.mxu0 0.0
    %645 = vmatprep.subr.mxu0 0.0
    %646 = vmatpush2.xpose.msra.mxu0 0.0
    %647 = vmatprep.subr.mxu0 0.0
    %648 = vmatpush2.xpose.msra.mxu0 0.0
    %649 = vmatprep.subr.mxu0 0.0
    %650 = vmatpush2.xpose.msra.mxu0 0.0
    %651 = vmatprep.subr.mxu0 0.0
    %652 = vmatpush2.xpose.msra.mxu0 0.0
    %653 = vmatprep.subr.mxu0 0.0
    %654 = vmatpush2.xpose.msra.mxu0 0.0
    %655 = vmatprep.subr.mxu0 0.0
    %656 = vmatpush2.xpose.msra.mxu0 0.0
    %657 = vmatprep.subr.mxu0 0.0
    %658 = vmatpush2.xpose.msra.mxu0 0.0
    %659 = vmatprep.subr.mxu0 0.0
    %660 = vmatpush2.xpose.msra.mxu0 0.0
    %661 = vmatprep.subr.mxu0 0.0
    %662 = vmatpush2.xpose.msra.mxu0 0.0
    %663 = vmatprep.subr.mxu0 0.0
    %664 = vmatpush2.xpose.msra.mxu0 0.0
    %665 = vmatprep.mubr.f32.mxu0 0.0
    %666 = vmatmul.mubr.f32.gmra.mxu0 %v599
    %v667 = vpop.f32.mrf.mxu0
    %v668 = vadd.f32 0.0, %v667
    %v669 = vpop.f32.mrf.mxu0
    %670 = vdwg.mxu0
    %v671 = vmul.f32 %v668, 0.25
    %v672 = vsel %vm202, %v671, -inf
    %673 = vmax.xlane.f32.xlu0 %v672
    %v674 = vpop.xlane.xlu0 %673
    %v675 = vsub.f32 %v671, %v674
    %v676 = vmul.f32 %v675, 1.442695
    %v677 = vpow.pop %v676
    %v678 = vsel %vm202, %v677, 0.0
    %679 = vadd.xlane.f32.xlu0 %v678
    %v680 = vpop.xlane.xlu0 %679
    %v681 = vrcp.pop %v680
    %v682 = vmul.f32 %v677, %v681
    %v684 = vsel %vm202, %v682, 0
    %686 = vmatprep.subr.mxu0 0.0
    %687 = vmatpush1.msra.mxu0 0.0
    %688 = vmatprep.subr.mxu0 0.0
    %689 = vmatpush1.msra.mxu0 0.0
    %690 = vmatprep.subr.mxu0 0.0
    %691 = vmatpush1.msra.mxu0 0.0
    %692 = vmatprep.subr.mxu0 0.0
    %693 = vmatpush1.msra.mxu0 0.0
    %694 = vmatprep.subr.mxu0 0.0
    %695 = vmatpush1.msra.mxu0 0.0
    %696 = vmatprep.subr.mxu0 0.0
    %697 = vmatpush1.msra.mxu0 0.0
    %698 = vmatprep.subr.mxu0 0.0
    %699 = vmatpush1.msra.mxu0 0.0
    %700 = vmatprep.subr.mxu0 0.0
    %701 = vmatpush1.msra.mxu0 0.0
    %702 = vmatprep.subr.mxu0 0.0
    %703 = vmatpush1.msra.mxu0 0.0
    %704 = vmatprep.subr.mxu0 0.0
    %705 = vmatpush1.msra.mxu0 0.0
    %706 = vmatprep.subr.mxu0 0.0
    %707 = vmatpush1.msra.mxu0 0.0
    %708 = vmatprep.subr.mxu0 0.0
    %709 = vmatpush1.msra.mxu0 0.0
    %710 = vmatprep.subr.mxu0 0.0
    %711 = vmatpush1.msra.mxu0 0.0
    %712 = vmatprep.subr.mxu0 0.0
    %713 = vmatpush1.msra.mxu0 0.0
    %714 = vmatprep.subr.mxu0 0.0
    %715 = vmatpush1.msra.mxu0 0.0
    %716 = vmatprep.subr.mxu0 0.0
    %717 = vmatpush1.msra.mxu0 %v124
    %718 = vmatprep.subr.mxu0 0.0
    %719 = vmatpush2.msra.mxu0 0.0
    %720 = vmatprep.subr.mxu0 0.0
    %721 = vmatpush2.msra.mxu0 0.0
    %722 = vmatprep.subr.mxu0 0.0
    %723 = vmatpush2.msra.mxu0 0.0
    %724 = vmatprep.subr.mxu0 0.0
    %725 = vmatpush2.msra.mxu0 0.0
    %726 = vmatprep.subr.mxu0 0.0
    %727 = vmatpush2.msra.mxu0 0.0
    %728 = vmatprep.subr.mxu0 0.0
    %729 = vmatpush2.msra.mxu0 0.0
    %730 = vmatprep.subr.mxu0 0.0
    %731 = vmatpush2.msra.mxu0 0.0
    %732 = vmatprep.subr.mxu0 0.0
    %733 = vmatpush2.msra.mxu0 0.0
    %734 = vmatprep.subr.mxu0 0.0
    %735 = vmatpush2.msra.mxu0 0.0
    %736 = vmatprep.subr.mxu0 0.0
    %737 = vmatpush2.msra.mxu0 0.0
    %738 = vmatprep.subr.mxu0 0.0
    %739 = vmatpush2.msra.mxu0 0.0
    %740 = vmatprep.subr.mxu0 0.0
    %741 = vmatpush2.msra.mxu0 0.0
    %742 = vmatprep.subr.mxu0 0.0
    %743 = vmatpush2.msra.mxu0 0.0
    %744 = vmatprep.subr.mxu0 0.0
    %745 = vmatpush2.msra.mxu0 0.0
    %746 = vmatprep.subr.mxu0 0.0
    %747 = vmatpush2.msra.mxu0 0.0
    %748 = vmatprep.subr.mxu0 0.0
    %749 = vmatpush2.msra.mxu0 0.0
    %750 = vmatprep.mubr.f32.mxu0 0.0
    %751 = vmatmul.mubr.f32.gmra.mxu0 %v684
    %v752 = vpop.f32.mrf.mxu0
    %v753 = vadd.f32 0.0, %v752
    %v754 = vpop.f32.mrf.mxu0
    %755 = vdwg.mxu0
    %756 = vrot.lane.b32.xlu0 %v124, 112
    %v757 = vpop.permute.xlu0 %756
    %v758 = vsel %vm127, %v757, 0
    %760 = vmatprep.subr.mxu0 0.0
    %761 = vmatpush1.xpose.msra.mxu0 0.0
    %762 = vmatprep.subr.mxu0 0.0
    %763 = vmatpush1.xpose.msra.mxu0 0.0
    %764 = vmatprep.subr.mxu0 0.0
    %765 = vmatpush1.xpose.msra.mxu0 0.0
    %766 = vmatprep.subr.mxu0 0.0
    %767 = vmatpush1.xpose.msra.mxu0 0.0
    %768 = vmatprep.subr.mxu0 0.0
    %769 = vmatpush1.xpose.msra.mxu0 0.0
    %770 = vmatprep.subr.mxu0 0.0
    %771 = vmatpush1.xpose.msra.mxu0 0.0
    %772 = vmatprep.subr.mxu0 0.0
    %773 = vmatpush1.xpose.msra.mxu0 0.0
    %774 = vmatprep.subr.mxu0 0.0
    %775 = vmatpush1.xpose.msra.mxu0 0.0
    %776 = vmatprep.subr.mxu0 0.0
    %777 = vmatpush1.xpose.msra.mxu0 0.0
    %778 = vmatprep.subr.mxu0 0.0
    %779 = vmatpush1.xpose.msra.mxu0 0.0
    %780 = vmatprep.subr.mxu0 0.0
    %781 = vmatpush1.xpose.msra.mxu0 0.0
    %782 = vmatprep.subr.mxu0 0.0
    %783 = vmatpush1.xpose.msra.mxu0 0.0
    %784 = vmatprep.subr.mxu0 0.0
    %785 = vmatpush1.xpose.msra.mxu0 0.0
    %786 = vmatprep.subr.mxu0 0.0
    %787 = vmatpush1.xpose.msra.mxu0 0.0
    %788 = vmatprep.subr.mxu0 0.0
    %789 = vmatpush1.xpose.msra.mxu0 0.0
    %790 = vmatprep.subr.mxu0 0.0
    %791 = vmatpush1.xpose.msra.mxu0 %v758
    %792 = vmatprep.subr.mxu0 0.0
    %793 = vmatpush2.xpose.msra.mxu0 0.0
    %794 = vmatprep.subr.mxu0 0.0
    %795 = vmatpush2.xpose.msra.mxu0 0.0
    %796 = vmatprep.subr.mxu0 0.0
    %797 = vmatpush2.xpose.msra.mxu0 0.0
    %798 = vmatprep.subr.mxu0 0.0
    %799 = vmatpush2.xpose.msra.mxu0 0.0
    %800 = vmatprep.subr.mxu0 0.0
    %801 = vmatpush2.xpose.msra.mxu0 0.0
    %802 = vmatprep.subr.mxu0 0.0
    %803 = vmatpush2.xpose.msra.mxu0 0.0
    %804 = vmatprep.subr.mxu0 0.0
    %805 = vmatpush2.xpose.msra.mxu0 0.0
    %806 = vmatprep.subr.mxu0 0.0
    %807 = vmatpush2.xpose.msra.mxu0 0.0
    %808 = vmatprep.subr.mxu0 0.0
    %809 = vmatpush2.xpose.msra.mxu0 0.0
    %810 = vmatprep.subr.mxu0 0.0
    %811 = vmatpush2.xpose.msra.mxu0 0.0
    %812 = vmatprep.subr.mxu0 0.0
    %813 = vmatpush2.xpose.msra.mxu0 0.0
    %814 = vmatprep.subr.mxu0 0.0
    %815 = vmatpush2.xpose.msra.mxu0 0.0
    %816 = vmatprep.subr.mxu0 0.0
    %817 = vmatpush2.xpose.msra.mxu0 0.0
    %818 = vmatprep.subr.mxu0 0.0
    %819 = vmatpush2.xpose.msra.mxu0 0.0
    %820 = vmatprep.subr.mxu0 0.0
    %821 = vmatpush2.xpose.msra.mxu0 0.0
    %822 = vmatprep.subr.mxu0 0.0
    %823 = vmatpush2.xpose.msra.mxu0 0.0
    %824 = vmatprep.mubr.f32.mxu0 0.0
    %825 = vmatmul.mubr.f32.gmra.mxu0 %v758
    %v826 = vpop.f32.mrf.mxu0
    %v827 = vadd.f32 0.0, %v826
    %v828 = vpop.f32.mrf.mxu0
    %829 = vdwg.mxu0
    %v830 = vmul.f32 %v827, 0.25
    %v831 = vsel %vm202, %v830, -inf
    %832 = vmax.xlane.f32.xlu0 %v831
    %v833 = vpop.xlane.xlu0 %832
    %v834 = vsub.f32 %v830, %v833
    %v835 = vmul.f32 %v834, 1.442695
    %v836 = vpow.pop %v835
    %v837 = vsel %vm202, %v836, 0.0
    %838 = vadd.xlane.f32.xlu0 %v837
    %v839 = vpop.xlane.xlu0 %838
    %v840 = vrcp.pop %v839
    %v841 = vmul.f32 %v836, %v840
    %v844 = vsel %vm202, %v841, 0
    %846 = vmatprep.subr.mxu0 0.0
    %847 = vmatpush1.msra.mxu0 0.0
    %848 = vmatprep.subr.mxu0 0.0
    %849 = vmatpush1.msra.mxu0 0.0
    %850 = vmatprep.subr.mxu0 0.0
    %851 = vmatpush1.msra.mxu0 0.0
    %852 = vmatprep.subr.mxu0 0.0
    %853 = vmatpush1.msra.mxu0 0.0
    %854 = vmatprep.subr.mxu0 0.0
    %855 = vmatpush1.msra.mxu0 0.0
    %856 = vmatprep.subr.mxu0 0.0
    %857 = vmatpush1.msra.mxu0 0.0
    %858 = vmatprep.subr.mxu0 0.0
    %859 = vmatpush1.msra.mxu0 0.0
    %860 = vmatprep.subr.mxu0 0.0
    %861 = vmatpush1.msra.mxu0 0.0
    %862 = vmatprep.subr.mxu0 0.0
    %863 = vmatpush1.msra.mxu0 0.0
    %864 = vmatprep.subr.mxu0 0.0
    %865 = vmatpush1.msra.mxu0 0.0
    %866 = vmatprep.subr.mxu0 0.0
    %867 = vmatpush1.msra.mxu0 0.0
    %868 = vmatprep.subr.mxu0 0.0
    %869 = vmatpush1.msra.mxu0 0.0
    %870 = vmatprep.subr.mxu0 0.0
    %871 = vmatpush1.msra.mxu0 0.0
    %872 = vmatprep.subr.mxu0 0.0
    %873 = vmatpush1.msra.mxu0 0.0
    %874 = vmatprep.subr.mxu0 0.0
    %875 = vmatpush1.msra.mxu0 0.0
    %876 = vmatprep.subr.mxu0 0.0
    %877 = vmatpush1.msra.mxu0 %v757
    %878 = vmatprep.subr.mxu0 0.0
    %879 = vmatpush2.msra.mxu0 0.0
    %880 = vmatprep.subr.mxu0 0.0
    %881 = vmatpush2.msra.mxu0 0.0
    %882 = vmatprep.subr.mxu0 0.0
    %883 = vmatpush2.msra.mxu0 0.0
    %884 = vmatprep.subr.mxu0 0.0
    %885 = vmatpush2.msra.mxu0 0.0
    %886 = vmatprep.subr.mxu0 0.0
    %887 = vmatpush2.msra.mxu0 0.0
    %888 = vmatprep.subr.mxu0 0.0
    %889 = vmatpush2.msra.mxu0 0.0
    %890 = vmatprep.subr.mxu0 0.0
    %891 = vmatpush2.msra.mxu0 0.0
    %892 = vmatprep.subr.mxu0 0.0
    %893 = vmatpush2.msra.mxu0 0.0
    %894 = vmatprep.subr.mxu0 0.0
    %895 = vmatpush2.msra.mxu0 0.0
    %896 = vmatprep.subr.mxu0 0.0
    %897 = vmatpush2.msra.mxu0 0.0
    %898 = vmatprep.subr.mxu0 0.0
    %899 = vmatpush2.msra.mxu0 0.0
    %900 = vmatprep.subr.mxu0 0.0
    %901 = vmatpush2.msra.mxu0 0.0
    %902 = vmatprep.subr.mxu0 0.0
    %903 = vmatpush2.msra.mxu0 0.0
    %904 = vmatprep.subr.mxu0 0.0
    %905 = vmatpush2.msra.mxu0 0.0
    %906 = vmatprep.subr.mxu0 0.0
    %907 = vmatpush2.msra.mxu0 0.0
    %908 = vmatprep.subr.mxu0 0.0
    %909 = vmatpush2.msra.mxu0 0.0
    %910 = vmatprep.mubr.f32.mxu0 0.0
    %911 = vmatmul.mubr.f32.gmra.mxu0 %v844
    %v912 = vpop.f32.mrf.mxu0
    %v913 = vadd.f32 0.0, %v912
    %v914 = vpop.f32.mrf.mxu0
    %915 = vdwg.mxu0
    %v917 = vsel %vm127, %v913, 0
    %919 = vmatprep.subr.mxu0 0.0
    %920 = vmatpush1.msra.mxu0 0.0
    %921 = vmatprep.subr.mxu0 0.0
    %922 = vmatpush1.msra.mxu0 0.0
    %923 = vmatprep.subr.mxu0 0.0
    %924 = vmatpush1.msra.mxu0 0.0
    %925 = vmatprep.subr.mxu0 0.0
    %926 = vmatpush1.msra.mxu0 0.0
    %927 = vmatprep.subr.mxu0 0.0
    %928 = vmatpush1.msra.mxu0 0.0
    %929 = vmatprep.subr.mxu0 0.0
    %930 = vmatpush1.msra.mxu0 0.0
    %931 = vmatprep.subr.mxu0 0.0
    %932 = vmatpush1.msra.mxu0 0.0
    %933 = vmatprep.subr.mxu0 0.0
    %934 = vmatpush1.msra.mxu0 0.0
    %935 = vmatprep.subr.mxu0 0.0
    %936 = vmatpush1.msra.mxu0 0.0
    %937 = vmatprep.subr.mxu0 0.0
    %938 = vmatpush1.msra.mxu0 0.0
    %939 = vmatprep.subr.mxu0 0.0
    %940 = vmatpush1.msra.mxu0 0.0
    %941 = vmatprep.subr.mxu0 0.0
    %942 = vmatpush1.msra.mxu0 0.0
    %943 = vmatprep.subr.mxu0 0.0
    %944 = vmatpush1.msra.mxu0 0.0
    %945 = vmatprep.subr.mxu0 0.0
    %946 = vmatpush1.msra.mxu0 0.0
    %947 = vmatprep.subr.mxu0 0.0
    %948 = vmatpush1.msra.mxu0 %v27
    %949 = vmatprep.subr.mxu0 0.0
    %950 = vmatpush1.msra.mxu0 %v26
    %951 = vmatprep.subr.mxu0 0.0
    %952 = vmatpush2.msra.mxu0 0.0
    %953 = vmatprep.subr.mxu0 0.0
    %954 = vmatpush2.msra.mxu0 0.0
    %955 = vmatprep.subr.mxu0 0.0
    %956 = vmatpush2.msra.mxu0 0.0
    %957 = vmatprep.subr.mxu0 0.0
    %958 = vmatpush2.msra.mxu0 0.0
    %959 = vmatprep.subr.mxu0 0.0
    %960 = vmatpush2.msra.mxu0 0.0
    %961 = vmatprep.subr.mxu0 0.0
    %962 = vmatpush2.msra.mxu0 0.0
    %963 = vmatprep.subr.mxu0 0.0
    %964 = vmatpush2.msra.mxu0 0.0
    %965 = vmatprep.subr.mxu0 0.0
    %966 = vmatpush2.msra.mxu0 0.0
    %967 = vmatprep.subr.mxu0 0.0
    %968 = vmatpush2.msra.mxu0 0.0
    %969 = vmatprep.subr.mxu0 0.0
    %970 = vmatpush2.msra.mxu0 0.0
    %971 = vmatprep.subr.mxu0 0.0
    %972 = vmatpush2.msra.mxu0 0.0
    %973 = vmatprep.subr.mxu0 0.0
    %974 = vmatpush2.msra.mxu0 0.0
    %975 = vmatprep.subr.mxu0 0.0
    %976 = vmatpush2.msra.mxu0 0.0
    %977 = vmatprep.subr.mxu0 0.0
    %978 = vmatpush2.msra.mxu0 0.0
    %979 = vmatprep.subr.mxu0 0.0
    %980 = vmatpush2.msra.mxu0 0.0
    %981 = vmatprep.subr.mxu0 0.0
    %982 = vmatpush2.msra.mxu0 0.0
    %983 = vmatprep.mubr.f32.mxu0 0.0
    %984 = vmatmul.mubr.f32.gmra.mxu0 %v917
    %v985 = vpop.f32.mrf.mxu0
    %v986 = vadd.f32 0.0, %v985
    %v987 = vpop.f32.mrf.mxu0
    %988 = vdwg.mxu0
    %v990 = vsel %vm127, %v753, 0
    %992 = vmatprep.subr.mxu0 0.0
    %993 = vmatpush1.msra.mxu0 0.0
    %994 = vmatprep.subr.mxu0 0.0
    %995 = vmatpush1.msra.mxu0 0.0
    %996 = vmatprep.subr.mxu0 0.0
    %997 = vmatpush1.msra.mxu0 0.0
    %998 = vmatprep.subr.mxu0 0.0
    %999 = vmatpush1.msra.mxu0 0.0
    %1000 = vmatprep.subr.mxu0 0.0
    %1001 = vmatpush1.msra.mxu0 0.0
    %1002 = vmatprep.subr.mxu0 0.0
    %1003 = vmatpush1.msra.mxu0 0.0
    %1004 = vmatprep.subr.mxu0 0.0
    %1005 = vmatpush1.msra.mxu0 0.0
    %1006 = vmatprep.subr.mxu0 0.0
    %1007 = vmatpush1.msra.mxu0 0.0
    %1008 = vmatprep.subr.mxu0 0.0
    %1009 = vmatpush1.msra.mxu0 0.0
    %1010 = vmatprep.subr.mxu0 0.0
    %1011 = vmatpush1.msra.mxu0 0.0
    %1012 = vmatprep.subr.mxu0 0.0
    %1013 = vmatpush1.msra.mxu0 0.0
    %1014 = vmatprep.subr.mxu0 0.0
    %1015 = vmatpush1.msra.mxu0 0.0
    %1016 = vmatprep.subr.mxu0 0.0
    %1017 = vmatpush1.msra.mxu0 0.0
    %1018 = vmatprep.subr.mxu0 0.0
    %1019 = vmatpush1.msra.mxu0 0.0
    %1020 = vmatprep.subr.mxu0 0.0
    %1021 = vmatpush1.msra.mxu0 %v25
    %1022 = vmatprep.subr.mxu0 0.0
    %1023 = vmatpush1.msra.mxu0 %v24
    %1024 = vmatprep.subr.mxu0 0.0
    %1025 = vmatpush2.msra.mxu0 0.0
    %1026 = vmatprep.subr.mxu0 0.0
    %1027 = vmatpush2.msra.mxu0 0.0
    %1028 = vmatprep.subr.mxu0 0.0
    %1029 = vmatpush2.msra.mxu0 0.0
    %1030 = vmatprep.subr.mxu0 0.0
    %1031 = vmatpush2.msra.mxu0 0.0
    %1032 = vmatprep.subr.mxu0 0.0
    %1033 = vmatpush2.msra.mxu0 0.0
    %1034 = vmatprep.subr.mxu0 0.0
    %1035 = vmatpush2.msra.mxu0 0.0
    %1036 = vmatprep.subr.mxu0 0.0
    %1037 = vmatpush2.msra.mxu0 0.0
    %1038 = vmatprep.subr.mxu0 0.0
    %1039 = vmatpush2.msra.mxu0 0.0
    %1040 = vmatprep.subr.mxu0 0.0
    %1041 = vmatpush2.msra.mxu0 0.0
    %1042 = vmatprep.subr.mxu0 0.0
    %1043 = vmatpush2.msra.mxu0 0.0
    %1044 = vmatprep.subr.mxu0 0.0
    %1045 = vmatpush2.msra.mxu0 0.0
    %1046 = vmatprep.subr.mxu0 0.0
    %1047 = vmatpush2.msra.mxu0 0.0
    %1048 = vmatprep.subr.mxu0 0.0
    %1049 = vmatpush2.msra.mxu0 0.0
    %1050 = vmatprep.subr.mxu0 0.0
    %1051 = vmatpush2.msra.mxu0 0.0
    %1052 = vmatprep.subr.mxu0 0.0
    %1053 = vmatpush2.msra.mxu0 0.0
    %1054 = vmatprep.subr.mxu0 0.0
    %1055 = vmatpush2.msra.mxu0 0.0
    %1056 = vmatprep.mubr.f32.mxu0 0.0
    %1057 = vmatmul.mubr.f32.gmra.mxu0 %v990
    %v1058 = vpop.f32.mrf.mxu0
    %v1059 = vadd.f32 %v986, %v1058
    %v1060 = vpop.f32.mrf.mxu0
    %1061 = vdwg.mxu0
    %v1062 = vadd.f32 %v1059, %v596
    %v1063 = vadd.f32 %v18, %v597
    %v1064 = vadd.f32 %v19, %v1062
    %v1065 = vsel %vm45, %v1063, 0.0
    %1066 = vadd.xlane.f32.xlu0 %v1065
    %v1067 = vpop.xlane.xlu0 %1066
    %v1068 = vsel %vm45, %v1064, 0.0
    %1069 = vadd.xlane.f32.xlu0 %v1068
    %v1070 = vpop.xlane.xlu0 %1069
    %v1071 = vrcp.pop 32.0
    %v1072 = vmul.f32 %v1067, %v1071
    %v1073 = vmul.f32 %v1070, %v1071
    %v1074 = vsub.f32 %v1063, %v1072
    %v1075 = vsub.f32 %v1064, %v1073
    %v1076 = vmul.f32 %v1074, %v1074
    %v1077 = vmul.f32 %v1075, %v1075
    %v1078 = vsel %vm45, %v1076, 0.0
    %1079 = vadd.xlane.f32.xlu0 %v1078
    %v1080 = vpop.xlane.xlu0 %1079
    %v1081 = vsel %vm45, %v1077, 0.0
    %1082 = vadd.xlane.f32.xlu0 %v1081
    %v1083 = vpop.xlane.xlu0 %1082
    %v1084 = vmul.f32 %v1080, %v1071
    %v1085 = vmul.f32 %v1083, %v1071
    %v1086 = vadd.f32 %v1084, 1e-05
    %v1087 = vadd.f32 %v1085, 1e-05
    %v1088 = vrsqrt.pop %v1086
    %v1089 = vrsqrt.pop %v1087
    %v1090 = vmul.f32 %v1074, %v1088
    %v1091 = vmul.f32 %v1075, %v1089
    %v1092 = vlaneseq
    %v1093 = vshrl.u32 %v1092, 7
    %v1094 = vsub.s32 2, %v1093
    %v1095 = vrot.slane %v40, %v1094
    %v1096 = vmul.f32 %v1090, %v1095
    %v1097 = vmul.f32 %v1091, %v1095
    %v1098 = vlaneseq
    %v1099 = vshrl.u32 %v1098, 7
    %v1100 = vsub.s32 3, %v1099
    %v1101 = vrot.slane %v40, %v1100
    %v1102 = vadd.f32 %v1096, %v1101
    %v1103 = vadd.f32 %v1097, %v1101
    %v1104 = vlaneseq
    %v1105 = vshrl.u32 %v1104, 7
    %v1106 = vsub.s32 4, %v1105
    %v1107 = vrot.slane %v40, %v1106
    %v1109 = vsel %vm45, %v1102, 0
    %v1112 = vsel %vm45, %v1103, 0
    %1114 = vmatprep.subr.mxu0 0.0
    %1115 = vmatpush1.msra.mxu0 0.0
    %1116 = vmatprep.subr.mxu0 0.0
    %1117 = vmatpush1.msra.mxu0 0.0
    %1118 = vmatprep.subr.mxu0 0.0
    %1119 = vmatpush1.msra.mxu0 0.0
    %1120 = vmatprep.subr.mxu0 0.0
    %1121 = vmatpush1.msra.mxu0 0.0
    %1122 = vmatprep.subr.mxu0 0.0
    %1123 = vmatpush1.msra.mxu0 0.0
    %1124 = vmatprep.subr.mxu0 0.0
    %1125 = vmatpush1.msra.mxu0 0.0
    %1126 = vmatprep.subr.mxu0 0.0
    %1127 = vmatpush1.msra.mxu0 0.0
    %1128 = vmatprep.subr.mxu0 0.0
    %1129 = vmatpush1.msra.mxu0 0.0
    %1130 = vmatprep.subr.mxu0 0.0
    %1131 = vmatpush1.msra.mxu0 0.0
    %1132 = vmatprep.subr.mxu0 0.0
    %1133 = vmatpush1.msra.mxu0 0.0
    %1134 = vmatprep.subr.mxu0 0.0
    %1135 = vmatpush1.msra.mxu0 0.0
    %1136 = vmatprep.subr.mxu0 0.0
    %1137 = vmatpush1.msra.mxu0 0.0
    %1138 = vmatprep.subr.mxu0 0.0
    %1139 = vmatpush1.msra.mxu0 %v39
    %1140 = vmatprep.subr.mxu0 0.0
    %1141 = vmatpush1.msra.mxu0 %v38
    %1142 = vmatprep.subr.mxu0 0.0
    %1143 = vmatpush1.msra.mxu0 %v37
    %1144 = vmatprep.subr.mxu0 0.0
    %1145 = vmatpush1.msra.mxu0 %v36
    %1146 = vmatprep.subr.mxu0 0.0
    %1147 = vmatpush2.msra.mxu0 0.0
    %1148 = vmatprep.subr.mxu0 0.0
    %1149 = vmatpush2.msra.mxu0 0.0
    %1150 = vmatprep.subr.mxu0 0.0
    %1151 = vmatpush2.msra.mxu0 0.0
    %1152 = vmatprep.subr.mxu0 0.0
    %1153 = vmatpush2.msra.mxu0 0.0
    %1154 = vmatprep.subr.mxu0 0.0
    %1155 = vmatpush2.msra.mxu0 0.0
    %1156 = vmatprep.subr.mxu0 0.0
    %1157 = vmatpush2.msra.mxu0 0.0
    %1158 = vmatprep.subr.mxu0 0.0
    %1159 = vmatpush2.msra.mxu0 0.0
    %1160 = vmatprep.subr.mxu0 0.0
    %1161 = vmatpush2.msra.mxu0 0.0
    %1162 = vmatprep.subr.mxu0 0.0
    %1163 = vmatpush2.msra.mxu0 0.0
    %1164 = vmatprep.subr.mxu0 0.0
    %1165 = vmatpush2.msra.mxu0 0.0
    %1166 = vmatprep.subr.mxu0 0.0
    %1167 = vmatpush2.msra.mxu0 0.0
    %1168 = vmatprep.subr.mxu0 0.0
    %1169 = vmatpush2.msra.mxu0 0.0
    %1170 = vmatprep.subr.mxu0 0.0
    %1171 = vmatpush2.msra.mxu0 0.0
    %1172 = vmatprep.subr.mxu0 0.0
    %1173 = vmatpush2.msra.mxu0 0.0
    %1174 = vmatprep.subr.mxu0 0.0
    %1175 = vmatpush2.msra.mxu0 0.0
    %1176 = vmatprep.subr.mxu0 0.0
    %1177 = vmatpush2.msra.mxu0 0.0
    %1178 = vmatprep.mubr.f32.mxu0 0.0
    %1179 = vmatmul.mubr.f32.gmra.mxu0 %v1109
    %v1180 = vpop.f32.mrf.mxu0
    %v1181 = vadd.f32 %v1107, %v1180
    %v1182 = vpop.f32.mrf.mxu0
    %1183 = vmatprep.mubr.f32.mxu0 0.0
    %1184 = vmatmul.mubr.f32.gmra.mxu0 %v1112
    %v1185 = vpop.f32.mrf.mxu0
    %v1186 = vadd.f32 %v1107, %v1185
    %v1187 = vpop.f32.mrf.mxu0
    %1188 = vdwg.mxu0
    %v1189 = vmax.f32 %v1181, 0.0
    %v1190 = vmax.f32 %v1186, 0.0
    %v1191 = vlaneseq
    %v1192 = vshrl.u32 %v1191, 7
    %v1193 = vsub.s32 5, %v1192
    %v1194 = vrot.slane %v40, %v1193
    %vm1195 = vcmask 523264
    %v1197 = vsel %vm1195, %v1189, 0
    %v1200 = vsel %vm1195, %v1190, 0
    %1202 = vmatprep.subr.mxu0 0.0
    %1203 = vmatpush1.msra.mxu0 0.0
    %1204 = vmatprep.subr.mxu0 0.0
    %1205 = vmatpush1.msra.mxu0 0.0
    %1206 = vmatprep.subr.mxu0 0.0
    %1207 = vmatpush1.msra.mxu0 0.0
    %1208 = vmatprep.subr.mxu0 0.0
    %1209 = vmatpush1.msra.mxu0 0.0
    %1210 = vmatprep.subr.mxu0 0.0
    %1211 = vmatpush1.msra.mxu0 0.0
    %1212 = vmatprep.subr.mxu0 0.0
    %1213 = vmatpush1.msra.mxu0 0.0
    %1214 = vmatprep.subr.mxu0 0.0
    %1215 = vmatpush1.msra.mxu0 0.0
    %1216 = vmatprep.subr.mxu0 0.0
    %1217 = vmatpush1.msra.mxu0 0.0
    %1218 = vmatprep.subr.mxu0 0.0
    %1219 = vmatpush1.msra.mxu0 %v35
    %1220 = vmatprep.subr.mxu0 0.0
    %1221 = vmatpush1.msra.mxu0 %v34
    %1222 = vmatprep.subr.mxu0 0.0
    %1223 = vmatpush1.msra.mxu0 %v33
    %1224 = vmatprep.subr.mxu0 0.0
    %1225 = vmatpush1.msra.mxu0 %v32
    %1226 = vmatprep.subr.mxu0 0.0
    %1227 = vmatpush1.msra.mxu0 %v31
    %1228 = vmatprep.subr.mxu0 0.0
    %1229 = vmatpush1.msra.mxu0 %v30
    %1230 = vmatprep.subr.mxu0 0.0
    %1231 = vmatpush1.msra.mxu0 %v29
    %1232 = vmatprep.subr.mxu0 0.0
    %1233 = vmatpush1.msra.mxu0 %v28
    %1234 = vmatprep.subr.mxu0 0.0
    %1235 = vmatpush2.msra.mxu0 0.0
    %1236 = vmatprep.subr.mxu0 0.0
    %1237 = vmatpush2.msra.mxu0 0.0
    %1238 = vmatprep.subr.mxu0 0.0
    %1239 = vmatpush2.msra.mxu0 0.0
    %1240 = vmatprep.subr.mxu0 0.0
    %1241 = vmatpush2.msra.mxu0 0.0
    %1242 = vmatprep.subr.mxu0 0.0
    %1243 = vmatpush2.msra.mxu0 0.0
    %1244 = vmatprep.subr.mxu0 0.0
    %1245 = vmatpush2.msra.mxu0 0.0
    %1246 = vmatprep.subr.mxu0 0.0
    %1247 = vmatpush2.msra.mxu0 0.0
    %1248 = vmatprep.subr.mxu0 0.0
    %1249 = vmatpush2.msra.mxu0 0.0
    %1250 = vmatprep.subr.mxu0 0.0
    %1251 = vmatpush2.msra.mxu0 0.0
    %1252 = vmatprep.subr.mxu0 0.0
    %1253 = vmatpush2.msra.mxu0 0.0
    %1254 = vmatprep.subr.mxu0 0.0
    %1255 = vmatpush2.msra.mxu0 0.0
    %1256 = vmatprep.subr.mxu0 0.0
    %1257 = vmatpush2.msra.mxu0 0.0
    %1258 = vmatprep.subr.mxu0 0.0
    %1259 = vmatpush2.msra.mxu0 0.0
    %1260 = vmatprep.subr.mxu0 0.0
    %1261 = vmatpush2.msra.mxu0 0.0
    %1262 = vmatprep.subr.mxu0 0.0
    %1263 = vmatpush2.msra.mxu0 0.0
    %1264 = vmatprep.subr.mxu0 0.0
    %1265 = vmatpush2.msra.mxu0 0.0
    %1266 = vmatprep.mubr.f32.mxu0 0.0
    %1267 = vmatmul.mubr.f32.gmra.mxu0 %v1197
    %v1268 = vpop.f32.mrf.mxu0
    %v1269 = vadd.f32 %v1194, %v1268
    %v1270 = vpop.f32.mrf.mxu0
    %1271 = vmatprep.mubr.f32.mxu0 0.0
    %1272 = vmatmul.mubr.f32.gmra.mxu0 %v1200
    %v1273 = vpop.f32.mrf.mxu0
    %v1274 = vadd.f32 %v1194, %v1273
    %v1275 = vpop.f32.mrf.mxu0
    %1276 = vdwg.mxu0
    %v1277 = vadd.f32 %v1102, %v1269
    %v1278 = vadd.f32 %v1103, %v1274
    %v1279 = vsel %vm45, %v1277, 0.0
    %1280 = vadd.xlane.f32.xlu0 %v1279
    %v1281 = vpop.xlane.xlu0 %1280
    %v1282 = vsel %vm45, %v1278, 0.0
    %1283 = vadd.xlane.f32.xlu0 %v1282
    %v1284 = vpop.xlane.xlu0 %1283
    %v1285 = vmul.f32 %v1281, %v1071
    %v1286 = vmul.f32 %v1284, %v1071
    %v1287 = vsub.f32 %v1277, %v1285
    %v1288 = vsub.f32 %v1278, %v1286
    %v1289 = vmul.f32 %v1287, %v1287
    %v1290 = vmul.f32 %v1288, %v1288
    %v1291 = vsel %vm45, %v1289, 0.0
    %1292 = vadd.xlane.f32.xlu0 %v1291
    %v1293 = vpop.xlane.xlu0 %1292
    %v1294 = vsel %vm45, %v1290, 0.0
    %1295 = vadd.xlane.f32.xlu0 %v1294
    %v1296 = vpop.xlane.xlu0 %1295
    %v1297 = vmul.f32 %v1293, %v1071
    %v1298 = vmul.f32 %v1296, %v1071
    %v1299 = vadd.f32 %v1297, 1e-05
    %v1300 = vadd.f32 %v1298, 1e-05
    %v1301 = vrsqrt.pop %v1299
    %v1302 = vrsqrt.pop %v1300
    %v1303 = vmul.f32 %v1287, %v1301
    %v1304 = vmul.f32 %v1288, %v1302
    %v1305 = vlaneseq
    %v1306 = vshrl.u32 %v1305, 7
    %v1307 = vsub.s32 6, %v1306
    %v1308 = vrot.slane %v40, %v1307
    %v1309 = vmul.f32 %v1303, %v1308
    %v1310 = vmul.f32 %v1304, %v1308
    %v1311 = vlaneseq
    %v1312 = vshrl.u32 %v1311, 7
    %v1313 = vsub.s32 7, %v1312
    %v1314 = vrot.slane %v40, %v1313
    %v1315 = vadd.f32 %v1309, %v1314
    %v1316 = vadd.f32 %v1310, %v1314
    %1317 = vst.msk [vmem:[#allocation2] sm:$0xff] %vm45, %v1315
    %1318 = vst.msk [vmem:[#allocation2 + $0x8] sm:$0xff] %vm45, %v1316
    // Predicated region
    $region18: #{tpu_custom_call.1} parent=1 // pred_check
      _
    $region19: #{tpu_custom_call.1} parent=1 // pred_check_branch
      %1320 = sbr.rel (0) target = $region21
    $region20: #{tpu_custom_call.1} parent=1 // pred_region
      %s1322 = ssub.s32 256, 256
      %1323 = vsyncadd [#allocation3], %s1322
      %s1324 = sshll.u32 [#allocation2], 4
      %s1325 = int_to_ptr.vmem [resolvable:$true] %s1324
      %1330 = dma.vmem_to_hbm [thread:$0]  %s1325, 256, %s4, [#allocation3], 128, 128, 8
    $region21: #{tpu_custom_call.1} parent=1 // pred_fallthru
      _
    // Predicated region
    $region22: #{tpu_custom_call.1} parent=1 // pred_check
      _
    $region23: #{tpu_custom_call.1} parent=1 // pred_check_branch
      %1332 = sbr.rel (0) target = $region25
    $region24: #{tpu_custom_call.1} parent=1 // pred_region
      %1333 = dma.done [#allocation3], 256
    $region25: #{tpu_custom_call.1} parent=1 // pred_fallthru
      _
    %1334 = vsyncpa [#allocation3], 1

</llo_original>
